<compile_context>
chip_gen: v7x
topology: tpu7x:2x2x1
jax: 0.10.0
libtpu: 0.0.40
codegen_flags: <defaults>
</compile_context>

<pallas_src>
import jax
import jax.numpy as jnp
from jax import lax
from jax.experimental import pallas as pl
from jax.experimental.pallas import tpu as pltpu

NUM_LAYERS = 3


def _round_up(v, m):
    return (v + m - 1) // m * m


def gine_kernel(x_ref, ea_ref, src_ref, dst_ref, batch_ref,
                enc_w_ref, enc_b_ref,
                edge_w_ref, edge_b_ref,
                w1_ref, b1_ref, w2_ref, b2_ref,
                pooled_ref,
                h_ref, h_bf_ref, agg_ref):
    layer = pl.program_id(0)
    eb = pl.program_id(1)
    n_eblk = pl.num_programs(1)

    n_pad = h_ref.shape[0]
    te = src_ref.shape[0]
    g_pad = pooled_ref.shape[0]

    # ---- one-time init: node encoder, bf16 x bf16 -> f32 on the MXU ----
    @pl.when((layer == 0) & (eb == 0))
    def _():
        h0 = jnp.dot(x_ref[...].astype(jnp.bfloat16), enc_w_ref[...],
                     preferred_element_type=jnp.float32) + enc_b_ref[...]
        h_ref[...] = h0
        h_bf_ref[...] = h0.astype(jnp.bfloat16)

    # ---- zero the neighborhood accumulator at the start of each layer ----
    @pl.when(eb == 0)
    def _():
        agg_ref[...] = jnp.zeros_like(agg_ref)

    # ---- message passing for this edge block ----
    # edge linear on the VPU (edge_dim == 1 -> rank-1 broadcast; skip the MXU)
    e_emb = ea_ref[...] * edge_w_ref[0] + edge_b_ref[0]              # [tE, Hp]

    # single iota orientation, reused for gather and scatter masks
    lane_iota = lax.broadcasted_iota(jnp.int32, (te, n_pad), 1)
    src_oh = (src_ref[...] == lane_iota).astype(jnp.bfloat16)        # [tE, Np]
    dst_oh = (dst_ref[...] == lane_iota).astype(jnp.bfloat16)        # [tE, Np]

    # gather x[src] on the MXU
    x_src = jnp.dot(src_oh, h_bf_ref[...],
                    preferred_element_type=jnp.float32)              # [tE, Hp]
    msg_bf = jnp.maximum(x_src + e_emb, 0.0).astype(jnp.bfloat16)

    # scatter-add to destination nodes: contract the edge axis (transposed-LHS
    # MXU feed), padded edges have dst == -1 and contribute nothing.
    agg_ref[...] += lax.dot_general(
        dst_oh, msg_bf,
        dimension_numbers=(((0,), (0,)), ((), ())),
        preferred_element_type=jnp.float32)                          # [Np, Hp]

    # ---- layer epilogue: GINE MLP (bias / ReLU after full edge reduction) ----
    @pl.when(eb == n_eblk - 1)
    def _():
        z = (h_ref[...] + agg_ref[...]).astype(jnp.bfloat16)   # (1+eps)*x + agg
        z1 = jnp.dot(z, w1_ref[0],
                     preferred_element_type=jnp.float32) + b1_ref[0]
        z1 = jnp.maximum(z1, 0.0).astype(jnp.bfloat16)
        z2 = jnp.dot(z1, w2_ref[0],
                     preferred_element_type=jnp.float32) + b2_ref[0]
        h_new = jnp.maximum(z2, 0.0)                           # outer F.relu
        h_ref[...] = h_new
        h_bf_ref[...] = h_new.astype(jnp.bfloat16)

    # ---- final readout: global_add_pool via bf16 one-hot matmul ----
    @pl.when((layer == pl.num_programs(0) - 1) & (eb == n_eblk - 1))
    def _():
        g_iota = lax.broadcasted_iota(jnp.int32, (n_pad, g_pad), 1)
        pool_oh = (batch_ref[...] == g_iota).astype(jnp.bfloat16)    # [Np, Gp]
        pooled_ref[...] = lax.dot_general(
            pool_oh, h_bf_ref[...],
            dimension_numbers=(((0,), (0,)), ((), ())),
            preferred_element_type=jnp.float32)                      # [Gp, Hp]


def _vmem_limit_bytes():
    # 75% of physical VMEM, capped at 100 MiB (~96 MiB on v5e/v6e, ~48 MiB v7x)
    try:
        info = pltpu.get_tpu_info()
        cap = getattr(info, "vmem_capacity_bytes", 64 * 1024 * 1024)
    except Exception:
        cap = 64 * 1024 * 1024
    return int(min(cap * 3 // 4, 100 * 1024 * 1024))


def gine_net_forward(x, edge_index, edge_attr, batch, params, num_graphs,
                     *, edge_tile=1024):
    assert edge_tile % 128 == 0, "edge_tile must be a multiple of 128"
    N, din = x.shape
    E = edge_attr.shape[0]
    H = params["enc_w"].shape[1]
    L = params["w1"].shape[0]
    assert params["edge_w"].shape[1] == 1  # TODO(synk): general edge_dim would use an MXU matmul for the edge linear; module default is edge_dim=1.

    h_pad = _round_up(H, 128)              # lane-dense hidden width
    n_pad = _round_up(N, 128)              # full MXU K-tiles for gather/scatter
    g_pad = _round_up(num_graphs, 8)
    if E <= edge_tile:
        e_pad = _round_up(E, 128)
        te = e_pad
    else:
        e_pad = _round_up(E, edge_tile)
        te = edge_tile
    n_eblk = e_pad // te

    f32, bf16 = jnp.float32, jnp.bfloat16
    # --- pad node / edge / graph data (no O(E*N) dense one-hots in HBM) ---
    x_p = jnp.zeros((n_pad, din), f32).at[:N].set(x.astype(f32))
    batch_p = jnp.full((n_pad, 1), -1, jnp.int32).at[:N, 0].set(
        batch.astype(jnp.int32))                       # padded nodes -> no graph
    ea_p = jnp.zeros((e_pad, 1), f32).at[:E].set(
        edge_attr.astype(f32).reshape(E, 1))
    src_p = jnp.zeros((e_pad, 1), jnp.int32).at[:E, 0].set(
        edge_index[0].astype(jnp.int32))
    dst_p = jnp.full((e_pad, 1), -1, jnp.int32).at[:E, 0].set(
        edge_index[1].astype(jnp.int32))               # padded edges scatter nowhere

    # --- zero-pad the hidden (lane) axis of all weights to h_pad ---
    def pad_h(a):   # pad last axis
        return jnp.pad(a, [(0, 0)] * (a.ndim - 1) + [(0, h_pad - a.shape[-1])])

    def pad_hh(a):  # pad last two axes
        return jnp.pad(a, [(0, 0)] * (a.ndim - 2)
                       + [(0, h_pad - a.shape[-2]), (0, h_pad - a.shape[-1])])

    enc_w = pad_h(params["enc_w"]).astype(bf16)        # bf16 MXU operand
    enc_b = pad_h(params["enc_b"])                     # f32 bias
    edge_w = pad_h(params["edge_w"])                   # VPU path, keep f32
    edge_b = pad_h(params["edge_b"])
    w1 = pad_hh(params["w1"]).astype(bf16)
    b1 = pad_h(params["b1"])
    w2 = pad_hh(params["w2"]).astype(bf16)
    b2 = pad_h(params["b2"])

    inputs = (x_p, ea_p, src_p, dst_p, batch_p,
              enc_w, enc_b, edge_w, edge_b, w1, b1, w2, b2)
    bytes_accessed = sum(int(a.size) * a.dtype.itemsize for a in inputs) \
        + g_pad * h_pad * 4
    flops = (2 * n_pad * din * h_pad                 # node encoder
             + 4 * L * e_pad * n_pad * h_pad         # gather + scatter matmuls
             + 4 * L * n_pad * h_pad * h_pad         # GINE MLP
             + 2 * n_pad * g_pad * h_pad)            # pooled readout
    cost = pl.CostEstimate(flops=int(flops), transcendentals=0,
                           bytes_accessed=int(bytes_accessed))

    def const(shape):
        return pl.BlockSpec(shape, lambda l, e: (0,) * len(shape))

    def per_layer(shape):
        return pl.BlockSpec(shape, lambda l, e: (l,) + (0,) * (len(shape) - 1))

    pooled = pl.pallas_call(
        gine_kernel,
        out_shape=jax.ShapeDtypeStruct((g_pad, h_pad), jnp.float32),
        grid=(L, n_eblk),
        in_specs=[
            const((n_pad, din)),                                  # x
            pl.BlockSpec((te, 1), lambda l, e: (e, 0)),           # edge_attr
            pl.BlockSpec((te, 1), lambda l, e: (e, 0)),           # src ids
            pl.BlockSpec((te, 1), lambda l, e: (e, 0)),           # dst ids
            const((n_pad, 1)),                                    # node->graph ids
            const((din, h_pad)), const((1, h_pad)),               # node encoder
            per_layer((1, 1, h_pad)), per_layer((1, 1, h_pad)),   # edge linear
            per_layer((1, h_pad, h_pad)), per_layer((1, 1, h_pad)),  # mlp lin1
            per_layer((1, h_pad, h_pad)), per_layer((1, 1, h_pad)),  # mlp lin2
        ],
        out_specs=const((g_pad, h_pad)),
        scratch_shapes=[
            pltpu.VMEM((n_pad, h_pad), jnp.float32),    # h (f32 master)
            pltpu.VMEM((n_pad, h_pad), jnp.bfloat16),   # h (bf16 copy for MXU)
            pltpu.VMEM((n_pad, h_pad), jnp.float32),    # agg accumulator
        ],
        compiler_params=pltpu.CompilerParams(
            dimension_semantics=("arbitrary", "arbitrary"),
            vmem_limit_bytes=_vmem_limit_bytes(),
        ),
        cost_estimate=cost,
    )(x_p, ea_p, src_p, dst_p, batch_p,
      enc_w, enc_b, edge_w, edge_b, w1, b1, w2, b2)

    # Tiny lane-sparse (H,1) output head applied outside the kernel so the
    # kernel's out_spec stays lane-dense (padded hidden lanes are exact zeros).
    out = pooled[:num_graphs, :H] @ params["out_w"] + params["out_b"]
    return out.squeeze()


def reference_forward(x, edge_index, edge_attr, batch, params, num_graphs):
    # Plain-JAX f32 reference for validation.
    h = x @ params["enc_w"] + params["enc_b"]
    for l in range(params["w1"].shape[0]):
        e = edge_attr @ params["edge_w"][l] + params["edge_b"][l]
        msg = jnp.maximum(h[edge_index[0]] + e, 0.0)
        agg = jnp.zeros_like(h).at[edge_index[1]].add(msg)
        z = h + agg
        z = jnp.maximum(z @ params["w1"][l] + params["b1"][l], 0.0)
        z = z @ params["w2"][l] + params["b2"][l]
        h = jnp.maximum(z, 0.0)
    pooled = jnp.zeros((num_graphs, h.shape[1]), h.dtype).at[batch].add(h)
    return (pooled @ params["out_w"] + params["out_b"]).squeeze()


def init_params(key, input_dim, edge_dim, hidden_dim, num_layers):
    ks = jax.random.split(key, 8)
    s = 0.1
    return {
        "enc_w": s * jax.random.normal(ks[0], (input_dim, hidden_dim), jnp.float32),
        "enc_b": s * jax.random.normal(ks[1], (1, hidden_dim), jnp.float32),
        "edge_w": s * jax.random.normal(ks[2], (num_layers, edge_dim, hidden_dim), jnp.float32),
        "edge_b": s * jax.random.normal(ks[3], (num_layers, 1, hidden_dim), jnp.float32),
        "w1": s * jax.random.normal(ks[4], (num_layers, hidden_dim, hidden_dim), jnp.float32),
        "b1": s * jax.random.normal(ks[5], (num_layers, 1, hidden_dim), jnp.float32),
        "w2": s * jax.random.normal(ks[6], (num_layers, hidden_dim, hidden_dim), jnp.float32),
        "b2": s * jax.random.normal(ks[7], (num_layers, 1, hidden_dim), jnp.float32),
        "out_w": s * jax.random.normal(jax.random.fold_in(key, 100), (hidden_dim, 1), jnp.float32),
        "out_b": s * jax.random.normal(jax.random.fold_in(key, 101), (1, 1), jnp.float32),
    }


if __name__ == "__main__":
    key = jax.random.PRNGKey(0)
    N, E, G = 16, 32, 2                      # nodes, edges, graphs
    input_dim, edge_dim, hidden_dim = 8, 1, 64

    kx, ke, ksrc, kdst, kp = jax.random.split(key, 5)
    x = jax.random.normal(kx, (N, input_dim), jnp.float32)
    edge_attr = jax.random.normal(ke, (E, edge_dim), jnp.float32)
    src = jax.random.randint(ksrc, (E,), 0, N)
    dst = jax.random.randint(kdst, (E,), 0, N)
    edge_index = jnp.stack([src, dst], axis=0)                     # [2, E]
    batch = jnp.concatenate([jnp.zeros(N // 2, jnp.int32),
                             jnp.ones(N - N // 2, jnp.int32)])     # node -> graph id

    params = init_params(kp, input_dim, edge_dim, hidden_dim, NUM_LAYERS)

    out = gine_net_forward(x, edge_index, edge_attr, batch, params, G)
    out = jax.block_until_ready(out)

    ref = reference_forward(x, edge_index, edge_attr, batch, params, G)
    assert out.shape == (G,)
    # bf16 is used for the exact 0/1 gather/scatter/pool masks and for the
    # MXU operands of the message / MLP matmuls (f32 accumulation), so the
    # tolerance vs. the pure-f32 reference is loose-ish.
    assert jnp.allclose(out, ref, atol=5e-2, rtol=5e-2), (out, ref)

    print("KERNEL_OK")
</pallas_src>

<mosaic_0001>
module attributes {stable_mosaic.version = 11 : i64} {
  func.func @gine_kernel(%arg0: i32, %arg1: i32, %arg2: memref<128x8xf32, #tpu.memory_space<vmem>>, %arg3: memref<128x1xf32, #tpu.memory_space<vmem>>, %arg4: memref<128x1xi32, #tpu.memory_space<vmem>>, %arg5: memref<128x1xi32, #tpu.memory_space<vmem>>, %arg6: memref<128x1xi32, #tpu.memory_space<vmem>>, %arg7: memref<8x128xbf16, #tpu.memory_space<vmem>>, %arg8: memref<1x128xf32, #tpu.memory_space<vmem>>, %arg9: memref<1x1x128xf32, #tpu.memory_space<vmem>>, %arg10: memref<1x1x128xf32, #tpu.memory_space<vmem>>, %arg11: memref<1x128x128xbf16, #tpu.memory_space<vmem>>, %arg12: memref<1x1x128xf32, #tpu.memory_space<vmem>>, %arg13: memref<1x128x128xbf16, #tpu.memory_space<vmem>>, %arg14: memref<1x1x128xf32, #tpu.memory_space<vmem>>, %arg15: memref<8x128xf32, #tpu.memory_space<vmem>>, %arg16: memref<128x128xf32, #tpu.memory_space<vmem>>, %arg17: memref<128x128xbf16, #tpu.memory_space<vmem>>, %arg18: memref<128x128xf32, #tpu.memory_space<vmem>>) attributes {dimension_semantics = [#tpu.dimension_semantics<arbitrary>, #tpu.dimension_semantics<arbitrary>], iteration_bounds = array<i64: 3, 1>, scalar_prefetch = 0 : i64, scratch_operands = 3 : i64, tpu.core_type = #tpu.core_type<tc>, window_params = [{pipeline_mode = #tpu.pipeline_mode<synchronous>, transform_indices = @transform_0, window_bounds = array<i64: 128, 8>}, {transform_indices = @transform_1, window_bounds = array<i64: 128, 1>}, {transform_indices = @transform_2, window_bounds = array<i64: 128, 1>}, {transform_indices = @transform_3, window_bounds = array<i64: 128, 1>}, {pipeline_mode = #tpu.pipeline_mode<synchronous>, transform_indices = @transform_4, window_bounds = array<i64: 128, 1>}, {pipeline_mode = #tpu.pipeline_mode<synchronous>, transform_indices = @transform_5, window_bounds = array<i64: 8, 128>}, {pipeline_mode = #tpu.pipeline_mode<synchronous>, transform_indices = @transform_6, window_bounds = array<i64: 1, 128>}, {transform_indices = @transform_7, window_bounds = array<i64: 1, 1, 128>}, {transform_indices = @transform_8, window_bounds = array<i64: 1, 1, 128>}, {transform_indices = @transform_9, window_bounds = array<i64: 1, 128, 128>}, {transform_indices = @transform_10, window_bounds = array<i64: 1, 1, 128>}, {transform_indices = @transform_11, window_bounds = array<i64: 1, 128, 128>}, {transform_indices = @transform_12, window_bounds = array<i64: 1, 1, 128>}, {pipeline_mode = #tpu.pipeline_mode<synchronous>, transform_indices = @transform_13, window_bounds = array<i64: 8, 128>}]} {
    %c0_i32 = arith.constant 0 : i32
    %0 = arith.cmpi eq, %arg0, %c0_i32 : i32
    %c0_i32_0 = arith.constant 0 : i32
    %1 = arith.cmpi eq, %arg1, %c0_i32_0 : i32
    %2 = arith.andi %0, %1 : i1
    %3 = arith.extui %2 : i1 to i32
    %c0_i32_1 = arith.constant 0 : i32
    %4 = arith.cmpi ne, %3, %c0_i32_1 : i32
    scf.if %4 {
      %c0_27 = arith.constant 0 : index
      %c0_28 = arith.constant 0 : index
      %49 = vector.load %arg2[%c0_27, %c0_28] : memref<128x8xf32, #tpu.memory_space<vmem>>, vector<128x8xf32>
      %50 = arith.truncf %49 : vector<128x8xf32> to vector<128x8xbf16>
      %c0_29 = arith.constant 0 : index
      %c0_30 = arith.constant 0 : index
      %51 = vector.load %arg7[%c0_29, %c0_30] : memref<8x128xbf16, #tpu.memory_space<vmem>>, vector<8x128xbf16>
      %cst_31 = arith.constant dense<0.000000e+00> : vector<128x128xf32>
      %52 = tpu.matmul %50, %51, %cst_31 {dimension_numbers = #tpu.dot_dimension_numbers<[1], [0], [0], [1], [0, 0, 1, 1], [], []>} : vector<128x8xbf16>, vector<8x128xbf16>, vector<128x128xf32> -> vector<128x128xf32>
      %c0_32 = arith.constant 0 : index
      %c0_33 = arith.constant 0 : index
      %53 = vector.load %arg8[%c0_32, %c0_33] : memref<1x128xf32, #tpu.memory_space<vmem>>, vector<1x128xf32>
      %54 = vector.broadcast %53 : vector<1x128xf32> to vector<128x128xf32>
      %55 = arith.addf %52, %54 : vector<128x128xf32>
      %c0_34 = arith.constant 0 : index
      %c0_35 = arith.constant 0 : index
      %56 = vector.load %arg16[%c0_34, %c0_35] : memref<128x128xf32, #tpu.memory_space<vmem>>, vector<128x128xf32>
      tpu.vector_store %arg16[%c0_34, %c0_35], %55 {strides = array<i32>} : memref<128x128xf32, #tpu.memory_space<vmem>>, vector<128x128xf32>,
      %57 = arith.truncf %55 : vector<128x128xf32> to vector<128x128xbf16>
      %c0_36 = arith.constant 0 : index
      %c0_37 = arith.constant 0 : index
      %58 = vector.load %arg17[%c0_36, %c0_37] : memref<128x128xbf16, #tpu.memory_space<vmem>>, vector<128x128xbf16>
      tpu.vector_store %arg17[%c0_36, %c0_37], %57 {strides = array<i32>} : memref<128x128xbf16, #tpu.memory_space<vmem>>, vector<128x128xbf16>,
    } else {
    }
    %c0_i32_2 = arith.constant 0 : i32
    %5 = arith.cmpi eq, %arg1, %c0_i32_2 : i32
    %6 = arith.extui %5 : i1 to i32
    %c0_i32_3 = arith.constant 0 : i32
    %7 = arith.cmpi ne, %6, %c0_i32_3 : i32
    scf.if %7 {
      %cst_27 = arith.constant 0.000000e+00 : f32
      %49 = vector.broadcast %cst_27 : f32 to vector<128x128xf32>
      %c0_28 = arith.constant 0 : index
      %c0_29 = arith.constant 0 : index
      %50 = vector.load %arg18[%c0_28, %c0_29] : memref<128x128xf32, #tpu.memory_space<vmem>>, vector<128x128xf32>
      tpu.vector_store %arg18[%c0_28, %c0_29], %49 {strides = array<i32>} : memref<128x128xf32, #tpu.memory_space<vmem>>, vector<128x128xf32>,
    } else {
    }
    %c0 = arith.constant 0 : index
    %c0_4 = arith.constant 0 : index
    %8 = vector.load %arg3[%c0, %c0_4] : memref<128x1xf32, #tpu.memory_space<vmem>>, vector<128x1xf32>
    %c0_5 = arith.constant 0 : index
    %c0_6 = arith.constant 0 : index
    %c0_7 = arith.constant 0 : index
    %9 = vector.load %arg9[%c0_5, %c0_6, %c0_7] : memref<1x1x128xf32, #tpu.memory_space<vmem>>, vector<1x1x128xf32>
    %10 = vector.shape_cast %9 : vector<1x1x128xf32> to vector<1x128xf32>
    %11 = vector.broadcast %8 : vector<128x1xf32> to vector<128x128xf32>
    %12 = vector.broadcast %10 : vector<1x128xf32> to vector<128x128xf32>
    %13 = arith.mulf %11, %12 : vector<128x128xf32>
    %c0_8 = arith.constant 0 : index
    %c0_9 = arith.constant 0 : index
    %c0_10 = arith.constant 0 : index
    %14 = vector.load %arg10[%c0_8, %c0_9, %c0_10] : memref<1x1x128xf32, #tpu.memory_space<vmem>>, vector<1x1x128xf32>
    %15 = vector.shape_cast %14 : vector<1x1x128xf32> to vector<1x128xf32>
    %16 = vector.broadcast %15 : vector<1x128xf32> to vector<128x128xf32>
    %17 = arith.addf %13, %16 : vector<128x128xf32>
    %18 = tpu.iota {dimensions = array<i32: 1>} : vector<128x128xi32>
    %c0_11 = arith.constant 0 : index
    %c0_12 = arith.constant 0 : index
    %19 = vector.load %arg4[%c0_11, %c0_12] : memref<128x1xi32, #tpu.memory_space<vmem>>, vector<128x1xi32>
    %20 = vector.broadcast %19 : vector<128x1xi32> to vector<128x128xi32>
    %21 = arith.cmpi eq, %20, %18 : vector<128x128xi32>
    %22 = arith.extui %21 : vector<128x128xi1> to vector<128x128xi32>
    %23 = arith.sitofp %22 : vector<128x128xi32> to vector<128x128xf32>
    %24 = arith.truncf %23 : vector<128x128xf32> to vector<128x128xbf16>
    %c0_13 = arith.constant 0 : index
    %c0_14 = arith.constant 0 : index
    %25 = vector.load %arg5[%c0_13, %c0_14] : memref<128x1xi32, #tpu.memory_space<vmem>>, vector<128x1xi32>
    %26 = vector.broadcast %25 : vector<128x1xi32> to vector<128x128xi32>
    %27 = arith.cmpi eq, %26, %18 : vector<128x128xi32>
    %28 = arith.extui %27 : vector<128x128xi1> to vector<128x128xi32>
    %29 = arith.sitofp %28 : vector<128x128xi32> to vector<128x128xf32>
    %30 = arith.truncf %29 : vector<128x128xf32> to vector<128x128xbf16>
    %c0_15 = arith.constant 0 : index
    %c0_16 = arith.constant 0 : index
    %31 = vector.load %arg17[%c0_15, %c0_16] : memref<128x128xbf16, #tpu.memory_space<vmem>>, vector<128x128xbf16>
    %cst = arith.constant dense<0.000000e+00> : vector<128x128xf32>
    %32 = tpu.matmul %24, %31, %cst {dimension_numbers = #tpu.dot_dimension_numbers<[1], [0], [0], [1], [0, 0, 1, 1], [], []>} : vector<128x128xbf16>, vector<128x128xbf16>, vector<128x128xf32> -> vector<128x128xf32>
    %33 = arith.addf %32, %17 : vector<128x128xf32>
    %cst_17 = arith.constant 0.000000e+00 : f32
    %34 = vector.broadcast %cst_17 : f32 to vector<128x128xf32>
    %35 = arith.maximumf %33, %34 : vector<128x128xf32>
    %36 = arith.truncf %35 : vector<128x128xf32> to vector<128x128xbf16>
    %c0_18 = arith.constant 0 : index
    %c0_19 = arith.constant 0 : index
    %37 = vector.load %arg18[%c0_18, %c0_19] : memref<128x128xf32, #tpu.memory_space<vmem>>, vector<128x128xf32>
    %cst_20 = arith.constant dense<0.000000e+00> : vector<128x128xf32>
    %38 = tpu.matmul %30, %36, %cst_20 {dimension_numbers = #tpu.dot_dimension_numbers<[0], [0], [1], [1], [0, 1, 1, 1], [], []>} : vector<128x128xbf16>, vector<128x128xbf16>, vector<128x128xf32> -> vector<128x128xf32>
    %39 = arith.addf %37, %38 : vector<128x128xf32>
    %c0_21 = arith.constant 0 : index
    %c0_22 = arith.constant 0 : index
    %40 = vector.load %arg18[%c0_21, %c0_22] : memref<128x128xf32, #tpu.memory_space<vmem>>, vector<128x128xf32>
    tpu.vector_store %arg18[%c0_21, %c0_22], %39 {strides = array<i32>} : memref<128x128xf32, #tpu.memory_space<vmem>>, vector<128x128xf32>,
    %c0_i32_23 = arith.constant 0 : i32
    %41 = arith.cmpi eq, %arg1, %c0_i32_23 : i32
    %42 = arith.extui %41 : i1 to i32
    %c0_i32_24 = arith.constant 0 : i32
    %43 = arith.cmpi ne, %42, %c0_i32_24 : i32
    scf.if %43 {
      %c0_27 = arith.constant 0 : index
      %c0_28 = arith.constant 0 : index
      %49 = vector.load %arg16[%c0_27, %c0_28] : memref<128x128xf32, #tpu.memory_space<vmem>>, vector<128x128xf32>
      %c0_29 = arith.constant 0 : index
      %c0_30 = arith.constant 0 : index
      %50 = vector.load %arg18[%c0_29, %c0_30] : memref<128x128xf32, #tpu.memory_space<vmem>>, vector<128x128xf32>
      %51 = arith.addf %49, %50 : vector<128x128xf32>
      %52 = arith.truncf %51 : vector<128x128xf32> to vector<128x128xbf16>
      %c0_31 = arith.constant 0 : index
      %c0_32 = arith.constant 0 : index
      %c0_33 = arith.constant 0 : index
      %53 = vector.load %arg11[%c0_31, %c0_32, %c0_33] : memref<1x128x128xbf16, #tpu.memory_space<vmem>>, vector<1x128x128xbf16>
      %54 = vector.shape_cast %53 : vector<1x128x128xbf16> to vector<128x128xbf16>
      %cst_34 = arith.constant dense<0.000000e+00> : vector<128x128xf32>
      %55 = tpu.matmul %52, %54, %cst_34 {dimension_numbers = #tpu.dot_dimension_numbers<[1], [0], [0], [1], [0, 0, 1, 1], [], []>} : vector<128x128xbf16>, vector<128x128xbf16>, vector<128x128xf32> -> vector<128x128xf32>
      %c0_35 = arith.constant 0 : index
      %c0_36 = arith.constant 0 : index
      %c0_37 = arith.constant 0 : index
      %56 = vector.load %arg12[%c0_35, %c0_36, %c0_37] : memref<1x1x128xf32, #tpu.memory_space<vmem>>, vector<1x1x128xf32>
      %57 = vector.shape_cast %56 : vector<1x1x128xf32> to vector<1x128xf32>
      %58 = vector.broadcast %57 : vector<1x128xf32> to vector<128x128xf32>
      %59 = arith.addf %55, %58 : vector<128x128xf32>
      %cst_38 = arith.constant 0.000000e+00 : f32
      %60 = vector.broadcast %cst_38 : f32 to vector<128x128xf32>
      %61 = arith.maximumf %59, %60 : vector<128x128xf32>
      %62 = arith.truncf %61 : vector<128x128xf32> to vector<128x128xbf16>
      %c0_39 = arith.constant 0 : index
      %c0_40 = arith.constant 0 : index
      %c0_41 = arith.constant 0 : index
      %63 = vector.load %arg13[%c0_39, %c0_40, %c0_41] : memref<1x128x128xbf16, #tpu.memory_space<vmem>>, vector<1x128x128xbf16>
      %64 = vector.shape_cast %63 : vector<1x128x128xbf16> to vector<128x128xbf16>
      %cst_42 = arith.constant dense<0.000000e+00> : vector<128x128xf32>
      %65 = tpu.matmul %62, %64, %cst_42 {dimension_numbers = #tpu.dot_dimension_numbers<[1], [0], [0], [1], [0, 0, 1, 1], [], []>} : vector<128x128xbf16>, vector<128x128xbf16>, vector<128x128xf32> -> vector<128x128xf32>
      %c0_43 = arith.constant 0 : index
      %c0_44 = arith.constant 0 : index
      %c0_45 = arith.constant 0 : index
      %66 = vector.load %arg14[%c0_43, %c0_44, %c0_45] : memref<1x1x128xf32, #tpu.memory_space<vmem>>, vector<1x1x128xf32>
      %67 = vector.shape_cast %66 : vector<1x1x128xf32> to vector<1x128xf32>
      %68 = vector.broadcast %67 : vector<1x128xf32> to vector<128x128xf32>
      %69 = arith.addf %65, %68 : vector<128x128xf32>
      %cst_46 = arith.constant 0.000000e+00 : f32
      %70 = vector.broadcast %cst_46 : f32 to vector<128x128xf32>
      %71 = arith.maximumf %69, %70 : vector<128x128xf32>
      %c0_47 = arith.constant 0 : index
      %c0_48 = arith.constant 0 : index
      %72 = vector.load %arg16[%c0_47, %c0_48] : memref<128x128xf32, #tpu.memory_space<vmem>>, vector<128x128xf32>
      tpu.vector_store %arg16[%c0_47, %c0_48], %71 {strides = array<i32>} : memref<128x128xf32, #tpu.memory_space<vmem>>, vector<128x128xf32>,
      %73 = arith.truncf %71 : vector<128x128xf32> to vector<128x128xbf16>
      %c0_49 = arith.constant 0 : index
      %c0_50 = arith.constant 0 : index
      %74 = vector.load %arg17[%c0_49, %c0_50] : memref<128x128xbf16, #tpu.memory_space<vmem>>, vector<128x128xbf16>
      tpu.vector_store %arg17[%c0_49, %c0_50], %73 {strides = array<i32>} : memref<128x128xbf16, #tpu.memory_space<vmem>>, vector<128x128xbf16>,
    } else {
    }
    %c2_i32 = arith.constant 2 : i32
    %44 = arith.cmpi eq, %arg0, %c2_i32 : i32
    %c0_i32_25 = arith.constant 0 : i32
    %45 = arith.cmpi eq, %arg1, %c0_i32_25 : i32
    %46 = arith.andi %44, %45 : i1
    %47 = arith.extui %46 : i1 to i32
    %c0_i32_26 = arith.constant 0 : i32
    %48 = arith.cmpi ne, %47, %c0_i32_26 : i32
    scf.if %48 {
      %49 = tpu.iota {dimensions = array<i32: 1>} : vector<128x8xi32>
      %c0_27 = arith.constant 0 : index
      %c0_28 = arith.constant 0 : index
      %50 = vector.load %arg6[%c0_27, %c0_28] : memref<128x1xi32, #tpu.memory_space<vmem>>, vector<128x1xi32>
      %51 = vector.broadcast %50 : vector<128x1xi32> to vector<128x8xi32>
      %52 = arith.cmpi eq, %51, %49 : vector<128x8xi32>
      %53 = arith.extui %52 : vector<128x8xi1> to vector<128x8xi32>
      %54 = arith.sitofp %53 : vector<128x8xi32> to vector<128x8xf32>
      %55 = arith.truncf %54 : vector<128x8xf32> to vector<128x8xbf16>
      %c0_29 = arith.constant 0 : index
      %c0_30 = arith.constant 0 : index
      %56 = vector.load %arg17[%c0_29, %c0_30] : memref<128x128xbf16, #tpu.memory_space<vmem>>, vector<128x128xbf16>
      %cst_31 = arith.constant dense<0.000000e+00> : vector<8x128xf32>
      %57 = tpu.matmul %55, %56, %cst_31 {dimension_numbers = #tpu.dot_dimension_numbers<[0], [0], [1], [1], [0, 1, 1, 1], [], []>} : vector<128x8xbf16>, vector<128x128xbf16>, vector<8x128xf32> -> vector<8x128xf32>
      %c0_32 = arith.constant 0 : index
      %c0_33 = arith.constant 0 : index
      %58 = vector.load %arg15[%c0_32, %c0_33] : memref<8x128xf32, #tpu.memory_space<vmem>>, vector<8x128xf32>
      tpu.vector_store %arg15[%c0_32, %c0_33], %57 {strides = array<i32>} : memref<8x128xf32, #tpu.memory_space<vmem>>, vector<8x128xf32>,
    } else {
    }
    return
  }
  func.func @transform_0(%arg0: i32, %arg1: i32) -> (i32, i32) {
    %c0_i32 = arith.constant 0 : i32
    %c0_i32_0 = arith.constant 0 : i32
    %c0_i32_1 = arith.constant 0 : i32
    return %c0_i32, %c0_i32_0 : i32, i32
  }
  func.func @transform_1(%arg0: i32, %arg1: i32) -> (i32, i32) {
    %c0_i32 = arith.constant 0 : i32
    %c0_i32_0 = arith.constant 0 : i32
    return %arg1, %c0_i32 : i32, i32
  }
  func.func @transform_2(%arg0: i32, %arg1: i32) -> (i32, i32) {
    %c0_i32 = arith.constant 0 : i32
    %c0_i32_0 = arith.constant 0 : i32
    return %arg1, %c0_i32 : i32, i32
  }
  func.func @transform_3(%arg0: i32, %arg1: i32) -> (i32, i32) {
    %c0_i32 = arith.constant 0 : i32
    %c0_i32_0 = arith.constant 0 : i32
    return %arg1, %c0_i32 : i32, i32
  }
  func.func @transform_4(%arg0: i32, %arg1: i32) -> (i32, i32) {
    %c0_i32 = arith.constant 0 : i32
    %c0_i32_0 = arith.constant 0 : i32
    %c0_i32_1 = arith.constant 0 : i32
    return %c0_i32, %c0_i32_0 : i32, i32
  }
  func.func @transform_5(%arg0: i32, %arg1: i32) -> (i32, i32) {
    %c0_i32 = arith.constant 0 : i32
    %c0_i32_0 = arith.constant 0 : i32
    %c0_i32_1 = arith.constant 0 : i32
    return %c0_i32, %c0_i32_0 : i32, i32
  }
  func.func @transform_6(%arg0: i32, %arg1: i32) -> (i32, i32) {
    %c0_i32 = arith.constant 0 : i32
    %c0_i32_0 = arith.constant 0 : i32
    %c0_i32_1 = arith.constant 0 : i32
    return %c0_i32, %c0_i32_0 : i32, i32
  }
  func.func @transform_7(%arg0: i32, %arg1: i32) -> (i32, i32, i32) {
    %c0_i32 = arith.constant 0 : i32
    %c0_i32_0 = arith.constant 0 : i32
    %c0_i32_1 = arith.constant 0 : i32
    return %arg0, %c0_i32, %c0_i32_0 : i32, i32, i32
  }
  func.func @transform_8(%arg0: i32, %arg1: i32) -> (i32, i32, i32) {
    %c0_i32 = arith.constant 0 : i32
    %c0_i32_0 = arith.constant 0 : i32
    %c0_i32_1 = arith.constant 0 : i32
    return %arg0, %c0_i32, %c0_i32_0 : i32, i32, i32
  }
  func.func @transform_9(%arg0: i32, %arg1: i32) -> (i32, i32, i32) {
    %c0_i32 = arith.constant 0 : i32
    %c0_i32_0 = arith.constant 0 : i32
    %c0_i32_1 = arith.constant 0 : i32
    return %arg0, %c0_i32, %c0_i32_0 : i32, i32, i32
  }
  func.func @transform_10(%arg0: i32, %arg1: i32) -> (i32, i32, i32) {
    %c0_i32 = arith.constant 0 : i32
    %c0_i32_0 = arith.constant 0 : i32
    %c0_i32_1 = arith.constant 0 : i32
    return %arg0, %c0_i32, %c0_i32_0 : i32, i32, i32
  }
  func.func @transform_11(%arg0: i32, %arg1: i32) -> (i32, i32, i32) {
    %c0_i32 = arith.constant 0 : i32
    %c0_i32_0 = arith.constant 0 : i32
    %c0_i32_1 = arith.constant 0 : i32
    return %arg0, %c0_i32, %c0_i32_0 : i32, i32, i32
  }
  func.func @transform_12(%arg0: i32, %arg1: i32) -> (i32, i32, i32) {
    %c0_i32 = arith.constant 0 : i32
    %c0_i32_0 = arith.constant 0 : i32
    %c0_i32_1 = arith.constant 0 : i32
    return %arg0, %c0_i32, %c0_i32_0 : i32, i32, i32
  }
  func.func @transform_13(%arg0: i32, %arg1: i32) -> (i32, i32) {
    %c0_i32 = arith.constant 0 : i32
    %c0_i32_0 = arith.constant 0 : i32
    %c0_i32_1 = arith.constant 0 : i32
    return %c0_i32, %c0_i32_0 : i32, i32
  }
}

</mosaic_0001>

<llo_original>
// kernel: tpu_custom_call.1
$region0: #{tpu_custom_call.1}
  #allocation0 [shape = 'u32[]', space=smem, size = 0x4, offset = 0x4, fixed_abs, tag = 'smem constant byte address 0x4 - core index']
  #allocation1 [shape = 'u32[144,128]{1,0:T(1,128)}', space=vmem, size = 0x12000, scoped, tag = 'internal scratch']
  #allocation2 [shape = 'f32[128,128]{1,0:T(8,128)}', space=vmem, size = 0x10000, scoped, tag = 'scratch operand']
  #allocation3 [shape = 'bf16[128,128]{1,0:T(16,128)(2,1)}', space=vmem, size = 0x8000, scoped, tag = 'scratch operand']
  #allocation4 [shape = 'f32[128,128]{1,0:T(8,128)}', space=vmem, size = 0x10000, scoped, tag = 'scratch operand']
  %s0 = inlined_call_operand.vmem [shape: f32[128,8], index: 0, kind: input, shape index: {}]
  %s1 = inlined_call_operand.vmem [shape: f32[128,1], index: 1, kind: input, shape index: {}]
  %s2 = inlined_call_operand.vmem [shape: s32[128,1], index: 2, kind: input, shape index: {}]
  %s3 = inlined_call_operand.vmem [shape: s32[128,1], index: 3, kind: input, shape index: {}]
  %s4 = inlined_call_operand.vmem [shape: s32[128,1], index: 4, kind: input, shape index: {}]
  %s5 = inlined_call_operand.vmem [shape: bf16[8,128], index: 5, kind: input, shape index: {}]
  %s6 = inlined_call_operand.vmem [shape: f32[1,128], index: 6, kind: input, shape index: {}]
  %s7 = inlined_call_operand.vmem [shape: f32[3,1,128], index: 7, kind: input, shape index: {}]
  %s8 = inlined_call_operand.vmem [shape: f32[3,1,128], index: 8, kind: input, shape index: {}]
  %s9 = inlined_call_operand.vmem [shape: bf16[3,128,128], index: 9, kind: input, shape index: {}]
  %s10 = inlined_call_operand.vmem [shape: f32[3,1,128], index: 10, kind: input, shape index: {}]
  %s11 = inlined_call_operand.vmem [shape: bf16[3,128,128], index: 11, kind: input, shape index: {}]
  %s12 = inlined_call_operand.vmem [shape: f32[3,1,128], index: 12, kind: input, shape index: {}]
  %s13 = inlined_call_operand.hbm [shape: f32[8,128], index: 13, kind: output, shape index: {}]
  %s14 = sld [smem:[#allocation0]]
  $region101: #{tpu_custom_call.1} parent=0
    _
  %s16 = ssub.s32 1, %s14
  %s17 = scalar_select 0, %s16, %s14
  $region1: #{tpu_custom_call.1} parent=0
    #allocation5 [shape = 'u8[4096]{0}', space=vmem, size = 0x1000, scoped, tag = 'output window, operand 0, single buffered']
    #allocation6 [shape = 's32[2]{0}', space=sflag, size = 0x8, scoped, tag = 'scoped memory for tpu_custom_call.1']
    %18 = vsyncpa [#allocation6], 0
    loop: start=0, step=1, limit=5
    $region2: #{tpu_custom_call.1} parent=1 // loop_pre_header
      _
    $region3: #{tpu_custom_call.1} parent=1 // loop_header
      %s20 = sphi 0, %s24
      %p21 = scmp.ge.s32.totalorder %s20, 5
      %s27 = sphi 0, %s39
      %s28 = sphi 0, %s35
      %s29 = sphi 0, %s27
      %s30 = sphi 0, %s28
      %s31 = sphi 0, %s29
      %s32 = sphi 0, %s30
      %s40 = sphi 0, %s40
      %s42 = sphi 0, %s40
      %s43 = sphi 0, %s42
      %s57 = sphi 0, %s43
      %s63 = sphi 0, %s65
      %s66 = sphi 0, %s63
      %s67 = sphi 0, %s66
      %s83 = sphi 0, %s67
      %s89 = sphi 0, %s91
      %s92 = sphi 0, %s89
      %s93 = sphi 0, %s92
      %s109 = sphi 0, %s93
      %s115 = sphi 0, %s117
      %s118 = sphi 0, %s115
      %s119 = sphi 0, %s118
      %s135 = sphi 0, %s119
      %s139 = sphi 0, %s139
      %s141 = sphi 0, %s139
      %s142 = sphi 0, %s141
      %s156 = sphi 0, %s142
      %s160 = sphi 0, %s160
      %s162 = sphi 0, %s160
      %s163 = sphi 0, %s162
      %s177 = sphi 0, %s163
      %s181 = sphi 0, %s181
      %s183 = sphi 0, %s181
      %s184 = sphi 0, %s183
      %s198 = sphi 0, %s184
      %s204 = sphi 0, %s206
      %s207 = sphi 0, %s204
      %s208 = sphi 0, %s207
      %s224 = sphi 0, %s208
      %s230 = sphi 0, %s232
      %s233 = sphi 0, %s230
      %s234 = sphi 0, %s233
      %s250 = sphi 0, %s234
      %s256 = sphi 0, %s258
      %s259 = sphi 0, %s256
      %s260 = sphi 0, %s259
      %s276 = sphi 0, %s260
      %s282 = sphi 0, %s284
      %s285 = sphi 0, %s282
      %s286 = sphi 0, %s285
      %s302 = sphi 0, %s286
      %s308 = sphi 0, %s310
      %s311 = sphi 0, %s308
      %s312 = sphi 0, %s311
      %s328 = sphi 0, %s312
      %s334 = sphi 0, %s336
      %s337 = sphi 0, %s334
      %s338 = sphi 0, %s337
      %s354 = sphi 0, %s338
      %s358 = sphi 0, %s358
      %s360 = sphi 0, %s358
      %s361 = sphi 0, %s360
      %s375 = sphi 0, %s361
    $region4: #{tpu_custom_call.1} parent=1 // loop_header_branch
      %23 = sbr.rel (%p21) target = $region8
    $region5: #{tpu_custom_call.1} parent=1 // loop_body
      %s25 = ssub.s32 %s20, 1
      %s26 = ssub.s32 %s20, 2
      %s33 = sadd.s32 1, %s28
      %p34 = scmp.ge.s32.totalorder %s33, 1
      %s35 = scalar_select %p34, 0, %s33
      %s36 = sadd.s32 1, %s27
      %s37 = scalar_select %p34, %s36, %s27
      %p38 = scmp.ge.s32.totalorder %s37, 3
      %s39 = scalar_select %p38, 0, %s37
      %s41 = sadd.s32 %s40, 1
      %p44 = scmp.eq.s32.totalorder %s20, 2
      %p45 = scmp.ne.s32.totalorder %s40, %s42
      %p46 = scmp.eq.s32.totalorder %s20, 0
      %p47 = por %p45, %p46
      %p48 = scmp.ne.s32.totalorder %s40, %s42
      %p49 = scmp.eq.s32.totalorder %s25, 2
      %p50 = por %p48, %p49
      %p51 = scmp.ne.s32.totalorder %s42, %s43
      %p52 = scmp.eq.s32.totalorder %s25, 0
      %p53 = por %p51, %p52
      %p54 = scmp.ne.s32.totalorder %s42, %s43
      %p55 = scmp.eq.s32.totalorder %s26, 2
      %p56 = por %p54, %p55
      %p58 = scmp.ne.s32.totalorder %s43, %s57
      %p59 = scmp.eq.s32.totalorder %s26, 0
      %p60 = por %p58, %p59
      %s61 = ssub.s32 %s28, %s35
      %p62 = scmp.eq.s32.totalorder %s61, 0
      %s64 = sadd.s32 %s63, 1
      %s65 = scalar_select %p62, %s63, %s64
      %p68 = pneg %p62
      %p69 = scmp.eq.s32.totalorder %s20, 2
      %p70 = por %p68, %p69
      %p71 = scmp.ne.s32.totalorder %s63, %s66
      %p72 = scmp.eq.s32.totalorder %s20, 0
      %p73 = por %p71, %p72
      %p74 = scmp.ne.s32.totalorder %s63, %s66
      %p75 = scmp.eq.s32.totalorder %s25, 2
      %p76 = por %p74, %p75
      %p77 = scmp.ne.s32.totalorder %s66, %s67
      %p78 = scmp.eq.s32.totalorder %s25, 0
      %p79 = por %p77, %p78
      %p80 = scmp.ne.s32.totalorder %s66, %s67
      %p81 = scmp.eq.s32.totalorder %s26, 2
      %p82 = por %p80, %p81
      %p84 = scmp.ne.s32.totalorder %s67, %s83
      %p85 = scmp.eq.s32.totalorder %s26, 0
      %p86 = por %p84, %p85
      %s87 = ssub.s32 %s28, %s35
      %p88 = scmp.eq.s32.totalorder %s87, 0
      %s90 = sadd.s32 %s89, 1
      %s91 = scalar_select %p88, %s89, %s90
      %p94 = pneg %p88
      %p95 = scmp.eq.s32.totalorder %s20, 2
      %p96 = por %p94, %p95
      %p97 = scmp.ne.s32.totalorder %s89, %s92
      %p98 = scmp.eq.s32.totalorder %s20, 0
      %p99 = por %p97, %p98
      %p100 = scmp.ne.s32.totalorder %s89, %s92
      %p101 = scmp.eq.s32.totalorder %s25, 2
      %p102 = por %p100, %p101
      %p103 = scmp.ne.s32.totalorder %s92, %s93
      %p104 = scmp.eq.s32.totalorder %s25, 0
      %p105 = por %p103, %p104
      %p106 = scmp.ne.s32.totalorder %s92, %s93
      %p107 = scmp.eq.s32.totalorder %s26, 2
      %p108 = por %p106, %p107
      %p110 = scmp.ne.s32.totalorder %s93, %s109
      %p111 = scmp.eq.s32.totalorder %s26, 0
      %p112 = por %p110, %p111
      %s113 = ssub.s32 %s28, %s35
      %p114 = scmp.eq.s32.totalorder %s113, 0
      %s116 = sadd.s32 %s115, 1
      %s117 = scalar_select %p114, %s115, %s116
      %p120 = pneg %p114
      %p121 = scmp.eq.s32.totalorder %s20, 2
      %p122 = por %p120, %p121
      %p123 = scmp.ne.s32.totalorder %s115, %s118
      %p124 = scmp.eq.s32.totalorder %s20, 0
      %p125 = por %p123, %p124
      %p126 = scmp.ne.s32.totalorder %s115, %s118
      %p127 = scmp.eq.s32.totalorder %s25, 2
      %p128 = por %p126, %p127
      %p129 = scmp.ne.s32.totalorder %s118, %s119
      %p130 = scmp.eq.s32.totalorder %s25, 0
      %p131 = por %p129, %p130
      %p132 = scmp.ne.s32.totalorder %s118, %s119
      %p133 = scmp.eq.s32.totalorder %s26, 2
      %p134 = por %p132, %p133
      %p136 = scmp.ne.s32.totalorder %s119, %s135
      %p137 = scmp.eq.s32.totalorder %s26, 0
      %p138 = por %p136, %p137
      %s140 = sadd.s32 %s139, 1
      %p143 = scmp.eq.s32.totalorder %s20, 2
      %p144 = scmp.ne.s32.totalorder %s139, %s141
      %p145 = scmp.eq.s32.totalorder %s20, 0
      %p146 = por %p144, %p145
      %p147 = scmp.ne.s32.totalorder %s139, %s141
      %p148 = scmp.eq.s32.totalorder %s25, 2
      %p149 = por %p147, %p148
      %p150 = scmp.ne.s32.totalorder %s141, %s142
      %p151 = scmp.eq.s32.totalorder %s25, 0
      %p152 = por %p150, %p151
      %p153 = scmp.ne.s32.totalorder %s141, %s142
      %p154 = scmp.eq.s32.totalorder %s26, 2
      %p155 = por %p153, %p154
      %p157 = scmp.ne.s32.totalorder %s142, %s156
      %p158 = scmp.eq.s32.totalorder %s26, 0
      %p159 = por %p157, %p158
      %s161 = sadd.s32 %s160, 1
      %p164 = scmp.eq.s32.totalorder %s20, 2
      %p165 = scmp.ne.s32.totalorder %s160, %s162
      %p166 = scmp.eq.s32.totalorder %s20, 0
      %p167 = por %p165, %p166
      %p168 = scmp.ne.s32.totalorder %s160, %s162
      %p169 = scmp.eq.s32.totalorder %s25, 2
      %p170 = por %p168, %p169
      %p171 = scmp.ne.s32.totalorder %s162, %s163
      %p172 = scmp.eq.s32.totalorder %s25, 0
      %p173 = por %p171, %p172
      %p174 = scmp.ne.s32.totalorder %s162, %s163
      %p175 = scmp.eq.s32.totalorder %s26, 2
      %p176 = por %p174, %p175
      %p178 = scmp.ne.s32.totalorder %s163, %s177
      %p179 = scmp.eq.s32.totalorder %s26, 0
      %p180 = por %p178, %p179
      %s182 = sadd.s32 %s181, 1
      %p185 = scmp.eq.s32.totalorder %s20, 2
      %p186 = scmp.ne.s32.totalorder %s181, %s183
      %p187 = scmp.eq.s32.totalorder %s20, 0
      %p188 = por %p186, %p187
      %p189 = scmp.ne.s32.totalorder %s181, %s183
      %p190 = scmp.eq.s32.totalorder %s25, 2
      %p191 = por %p189, %p190
      %p192 = scmp.ne.s32.totalorder %s183, %s184
      %p193 = scmp.eq.s32.totalorder %s25, 0
      %p194 = por %p192, %p193
      %p195 = scmp.ne.s32.totalorder %s183, %s184
      %p196 = scmp.eq.s32.totalorder %s26, 2
      %p197 = por %p195, %p196
      %p199 = scmp.ne.s32.totalorder %s184, %s198
      %p200 = scmp.eq.s32.totalorder %s26, 0
      %p201 = por %p199, %p200
      %s202 = ssub.s32 %s27, %s39
      %p203 = scmp.eq.s32.totalorder %s202, 0
      %s205 = sadd.s32 %s204, 1
      %s206 = scalar_select %p203, %s204, %s205
      %p209 = pneg %p203
      %p210 = scmp.eq.s32.totalorder %s20, 2
      %p211 = por %p209, %p210
      %p212 = scmp.ne.s32.totalorder %s204, %s207
      %p213 = scmp.eq.s32.totalorder %s20, 0
      %p214 = por %p212, %p213
      %p215 = scmp.ne.s32.totalorder %s204, %s207
      %p216 = scmp.eq.s32.totalorder %s25, 2
      %p217 = por %p215, %p216
      %p218 = scmp.ne.s32.totalorder %s207, %s208
      %p219 = scmp.eq.s32.totalorder %s25, 0
      %p220 = por %p218, %p219
      %p221 = scmp.ne.s32.totalorder %s207, %s208
      %p222 = scmp.eq.s32.totalorder %s26, 2
      %p223 = por %p221, %p222
      %p225 = scmp.ne.s32.totalorder %s208, %s224
      %p226 = scmp.eq.s32.totalorder %s26, 0
      %p227 = por %p225, %p226
      %s228 = ssub.s32 %s27, %s39
      %p229 = scmp.eq.s32.totalorder %s228, 0
      %s231 = sadd.s32 %s230, 1
      %s232 = scalar_select %p229, %s230, %s231
      %p235 = pneg %p229
      %p236 = scmp.eq.s32.totalorder %s20, 2
      %p237 = por %p235, %p236
      %p238 = scmp.ne.s32.totalorder %s230, %s233
      %p239 = scmp.eq.s32.totalorder %s20, 0
      %p240 = por %p238, %p239
      %p241 = scmp.ne.s32.totalorder %s230, %s233
      %p242 = scmp.eq.s32.totalorder %s25, 2
      %p243 = por %p241, %p242
      %p244 = scmp.ne.s32.totalorder %s233, %s234
      %p245 = scmp.eq.s32.totalorder %s25, 0
      %p246 = por %p244, %p245
      %p247 = scmp.ne.s32.totalorder %s233, %s234
      %p248 = scmp.eq.s32.totalorder %s26, 2
      %p249 = por %p247, %p248
      %p251 = scmp.ne.s32.totalorder %s234, %s250
      %p252 = scmp.eq.s32.totalorder %s26, 0
      %p253 = por %p251, %p252
      %s254 = ssub.s32 %s27, %s39
      %p255 = scmp.eq.s32.totalorder %s254, 0
      %s257 = sadd.s32 %s256, 1
      %s258 = scalar_select %p255, %s256, %s257
      %p261 = pneg %p255
      %p262 = scmp.eq.s32.totalorder %s20, 2
      %p263 = por %p261, %p262
      %p264 = scmp.ne.s32.totalorder %s256, %s259
      %p265 = scmp.eq.s32.totalorder %s20, 0
      %p266 = por %p264, %p265
      %p267 = scmp.ne.s32.totalorder %s256, %s259
      %p268 = scmp.eq.s32.totalorder %s25, 2
      %p269 = por %p267, %p268
      %p270 = scmp.ne.s32.totalorder %s259, %s260
      %p271 = scmp.eq.s32.totalorder %s25, 0
      %p272 = por %p270, %p271
      %p273 = scmp.ne.s32.totalorder %s259, %s260
      %p274 = scmp.eq.s32.totalorder %s26, 2
      %p275 = por %p273, %p274
      %p277 = scmp.ne.s32.totalorder %s260, %s276
      %p278 = scmp.eq.s32.totalorder %s26, 0
      %p279 = por %p277, %p278
      %s280 = ssub.s32 %s27, %s39
      %p281 = scmp.eq.s32.totalorder %s280, 0
      %s283 = sadd.s32 %s282, 1
      %s284 = scalar_select %p281, %s282, %s283
      %p287 = pneg %p281
      %p288 = scmp.eq.s32.totalorder %s20, 2
      %p289 = por %p287, %p288
      %p290 = scmp.ne.s32.totalorder %s282, %s285
      %p291 = scmp.eq.s32.totalorder %s20, 0
      %p292 = por %p290, %p291
      %p293 = scmp.ne.s32.totalorder %s282, %s285
      %p294 = scmp.eq.s32.totalorder %s25, 2
      %p295 = por %p293, %p294
      %p296 = scmp.ne.s32.totalorder %s285, %s286
      %p297 = scmp.eq.s32.totalorder %s25, 0
      %p298 = por %p296, %p297
      %p299 = scmp.ne.s32.totalorder %s285, %s286
      %p300 = scmp.eq.s32.totalorder %s26, 2
      %p301 = por %p299, %p300
      %p303 = scmp.ne.s32.totalorder %s286, %s302
      %p304 = scmp.eq.s32.totalorder %s26, 0
      %p305 = por %p303, %p304
      %s306 = ssub.s32 %s27, %s39
      %p307 = scmp.eq.s32.totalorder %s306, 0
      %s309 = sadd.s32 %s308, 1
      %s310 = scalar_select %p307, %s308, %s309
      %p313 = pneg %p307
      %p314 = scmp.eq.s32.totalorder %s20, 2
      %p315 = por %p313, %p314
      %p316 = scmp.ne.s32.totalorder %s308, %s311
      %p317 = scmp.eq.s32.totalorder %s20, 0
      %p318 = por %p316, %p317
      %p319 = scmp.ne.s32.totalorder %s308, %s311
      %p320 = scmp.eq.s32.totalorder %s25, 2
      %p321 = por %p319, %p320
      %p322 = scmp.ne.s32.totalorder %s311, %s312
      %p323 = scmp.eq.s32.totalorder %s25, 0
      %p324 = por %p322, %p323
      %p325 = scmp.ne.s32.totalorder %s311, %s312
      %p326 = scmp.eq.s32.totalorder %s26, 2
      %p327 = por %p325, %p326
      %p329 = scmp.ne.s32.totalorder %s312, %s328
      %p330 = scmp.eq.s32.totalorder %s26, 0
      %p331 = por %p329, %p330
      %s332 = ssub.s32 %s27, %s39
      %p333 = scmp.eq.s32.totalorder %s332, 0
      %s335 = sadd.s32 %s334, 1
      %s336 = scalar_select %p333, %s334, %s335
      %p339 = pneg %p333
      %p340 = scmp.eq.s32.totalorder %s20, 2
      %p341 = por %p339, %p340
      %p342 = scmp.ne.s32.totalorder %s334, %s337
      %p343 = scmp.eq.s32.totalorder %s20, 0
      %p344 = por %p342, %p343
      %p345 = scmp.ne.s32.totalorder %s334, %s337
      %p346 = scmp.eq.s32.totalorder %s25, 2
      %p347 = por %p345, %p346
      %p348 = scmp.ne.s32.totalorder %s337, %s338
      %p349 = scmp.eq.s32.totalorder %s25, 0
      %p350 = por %p348, %p349
      %p351 = scmp.ne.s32.totalorder %s337, %s338
      %p352 = scmp.eq.s32.totalorder %s26, 2
      %p353 = por %p351, %p352
      %p355 = scmp.ne.s32.totalorder %s338, %s354
      %p356 = scmp.eq.s32.totalorder %s26, 0
      %p357 = por %p355, %p356
      %s359 = sadd.s32 %s358, 1
      %p362 = scmp.eq.s32.totalorder %s20, 2
      %p363 = scmp.ne.s32.totalorder %s358, %s360
      %p364 = scmp.eq.s32.totalorder %s20, 0
      %p365 = por %p363, %p364
      %p366 = scmp.ne.s32.totalorder %s358, %s360
      %p367 = scmp.eq.s32.totalorder %s25, 2
      %p368 = por %p366, %p367
      %p369 = scmp.ne.s32.totalorder %s360, %s361
      %p370 = scmp.eq.s32.totalorder %s25, 0
      %p371 = por %p369, %p370
      %p372 = scmp.ne.s32.totalorder %s360, %s361
      %p373 = scmp.eq.s32.totalorder %s26, 2
      %p374 = por %p372, %p373
      %p376 = scmp.ne.s32.totalorder %s361, %s375
      %p377 = scmp.eq.s32.totalorder %s26, 0
      %p378 = por %p376, %p377
      %p379 = scmp.le.s32.totalorder 1, %s20
      %p380 = scmp.lt.s32.totalorder %s20, 4
      %p381 = pnand %p379, %p380
      %p382 = pneg %p381
      // Predicated region
      $region9: #{tpu_custom_call.1} parent=5 // pred_check
        _
      $region10: #{tpu_custom_call.1} parent=5 // pred_check_branch
        %384 = sbr.rel (%p381) target = $region12
      $region11: #{tpu_custom_call.1} parent=5 // pred_region
        %s385 = ssub.s32 %s20, 1
        // Predicated region
        $region13: #{tpu_custom_call.1} parent=11 // pred_check
          %p386 = pneg %p53
        $region14: #{tpu_custom_call.1} parent=11 // pred_check_branch
          %388 = sbr.rel (%p386) target = $region16
        $region15: #{tpu_custom_call.1} parent=11 // pred_region
          _
        $region16: #{tpu_custom_call.1} parent=11 // pred_fallthru
          _
        // Predicated region
        $region17: #{tpu_custom_call.1} parent=11 // pred_check
          %p389 = pneg %p79
        $region18: #{tpu_custom_call.1} parent=11 // pred_check_branch
          %391 = sbr.rel (%p389) target = $region20
        $region19: #{tpu_custom_call.1} parent=11 // pred_region
          %s392 = smul.u32 16, %s30
          %p393 = scmp.lt.s32.totalorder %s392, 15
          %s394 = scalar_select %p393, %s392, 15
          %s395 = smul.addr %s394, 8
          %s396 = scalar_lea.vmem %s1, %s395
          %s397 = smul.u32 16, %s30
        $region20: #{tpu_custom_call.1} parent=11 // pred_fallthru
          _
        // Predicated region
        $region21: #{tpu_custom_call.1} parent=11 // pred_check
          %p398 = pneg %p105
        $region22: #{tpu_custom_call.1} parent=11 // pred_check_branch
          %400 = sbr.rel (%p398) target = $region24
        $region23: #{tpu_custom_call.1} parent=11 // pred_region
          %s401 = smul.u32 16, %s30
          %p402 = scmp.lt.s32.totalorder %s401, 15
          %s403 = scalar_select %p402, %s401, 15
          %s404 = smul.addr %s403, 8
          %s405 = scalar_lea.vmem %s2, %s404
          %s406 = smul.u32 16, %s30
        $region24: #{tpu_custom_call.1} parent=11 // pred_fallthru
          _
        // Predicated region
        $region25: #{tpu_custom_call.1} parent=11 // pred_check
          %p407 = pneg %p131
        $region26: #{tpu_custom_call.1} parent=11 // pred_check_branch
          %409 = sbr.rel (%p407) target = $region28
        $region27: #{tpu_custom_call.1} parent=11 // pred_region
          %s410 = smul.u32 16, %s30
          %p411 = scmp.lt.s32.totalorder %s410, 15
          %s412 = scalar_select %p411, %s410, 15
          %s413 = smul.addr %s412, 8
          %s414 = scalar_lea.vmem %s3, %s413
          %s415 = smul.u32 16, %s30
        $region28: #{tpu_custom_call.1} parent=11 // pred_fallthru
          _
        // Predicated region
        $region29: #{tpu_custom_call.1} parent=11 // pred_check
          %p416 = pneg %p152
        $region30: #{tpu_custom_call.1} parent=11 // pred_check_branch
          %418 = sbr.rel (%p416) target = $region32
        $region31: #{tpu_custom_call.1} parent=11 // pred_region
          _
        $region32: #{tpu_custom_call.1} parent=11 // pred_fallthru
          _
        // Predicated region
        $region33: #{tpu_custom_call.1} parent=11 // pred_check
          %p419 = pneg %p173
        $region34: #{tpu_custom_call.1} parent=11 // pred_check_branch
          %421 = sbr.rel (%p419) target = $region36
        $region35: #{tpu_custom_call.1} parent=11 // pred_region
          _
        $region36: #{tpu_custom_call.1} parent=11 // pred_fallthru
          _
        // Predicated region
        $region37: #{tpu_custom_call.1} parent=11 // pred_check
          %p422 = pneg %p194
        $region38: #{tpu_custom_call.1} parent=11 // pred_check_branch
          %424 = sbr.rel (%p422) target = $region40
        $region39: #{tpu_custom_call.1} parent=11 // pred_region
          _
        $region40: #{tpu_custom_call.1} parent=11 // pred_fallthru
          _
      $region12: #{tpu_custom_call.1} parent=5 // pred_fallthru
        _
      %p425 = scmp.lt.s32.totalorder %s20, 3
      // Predicated region
      $region41: #{tpu_custom_call.1} parent=5 // pred_check
        %p426 = pneg %p425
      $region42: #{tpu_custom_call.1} parent=5 // pred_check_branch
        %428 = sbr.rel (%p426) target = $region44
      $region43: #{tpu_custom_call.1} parent=5 // pred_region
        // Predicated region
        $region45: #{tpu_custom_call.1} parent=43 // pred_check
          %p429 = pneg %p214
        $region46: #{tpu_custom_call.1} parent=43 // pred_check_branch
          %431 = sbr.rel (%p429) target = $region48
        $region47: #{tpu_custom_call.1} parent=43 // pred_region
          %p432 = scmp.lt.s32.totalorder %s27, 2
          %s433 = scalar_select %p432, %s27, 2
          %s434 = scalar_lea.vmem %s7, %s433
        $region48: #{tpu_custom_call.1} parent=43 // pred_fallthru
          _
        // Predicated region
        $region49: #{tpu_custom_call.1} parent=43 // pred_check
          %p435 = pneg %p240
        $region50: #{tpu_custom_call.1} parent=43 // pred_check_branch
          %437 = sbr.rel (%p435) target = $region52
        $region51: #{tpu_custom_call.1} parent=43 // pred_region
          %p438 = scmp.lt.s32.totalorder %s27, 2
          %s439 = scalar_select %p438, %s27, 2
          %s440 = scalar_lea.vmem %s8, %s439
        $region52: #{tpu_custom_call.1} parent=43 // pred_fallthru
          _
        // Predicated region
        $region53: #{tpu_custom_call.1} parent=43 // pred_check
          %p441 = pneg %p266
        $region54: #{tpu_custom_call.1} parent=43 // pred_check_branch
          %443 = sbr.rel (%p441) target = $region56
        $region55: #{tpu_custom_call.1} parent=43 // pred_region
          %p444 = scmp.lt.s32.totalorder %s27, 2
          %s445 = scalar_select %p444, %s27, 2
          %s446 = smul.addr %s445, 16
          %s447 = smul.addr %s446, 4
          %s448 = scalar_lea.vmem %s9, %s447
        $region56: #{tpu_custom_call.1} parent=43 // pred_fallthru
          _
        // Predicated region
        $region57: #{tpu_custom_call.1} parent=43 // pred_check
          %p449 = pneg %p292
        $region58: #{tpu_custom_call.1} parent=43 // pred_check_branch
          %451 = sbr.rel (%p449) target = $region60
        $region59: #{tpu_custom_call.1} parent=43 // pred_region
          %p452 = scmp.lt.s32.totalorder %s27, 2
          %s453 = scalar_select %p452, %s27, 2
          %s454 = scalar_lea.vmem %s10, %s453
        $region60: #{tpu_custom_call.1} parent=43 // pred_fallthru
          _
        // Predicated region
        $region61: #{tpu_custom_call.1} parent=43 // pred_check
          %p455 = pneg %p318
        $region62: #{tpu_custom_call.1} parent=43 // pred_check_branch
          %457 = sbr.rel (%p455) target = $region64
        $region63: #{tpu_custom_call.1} parent=43 // pred_region
          %p458 = scmp.lt.s32.totalorder %s27, 2
          %s459 = scalar_select %p458, %s27, 2
          %s460 = smul.addr %s459, 16
          %s461 = smul.addr %s460, 4
          %s462 = scalar_lea.vmem %s11, %s461
        $region64: #{tpu_custom_call.1} parent=43 // pred_fallthru
          _
        // Predicated region
        $region65: #{tpu_custom_call.1} parent=43 // pred_check
          %p463 = pneg %p344
        $region66: #{tpu_custom_call.1} parent=43 // pred_check_branch
          %465 = sbr.rel (%p463) target = $region68
        $region67: #{tpu_custom_call.1} parent=43 // pred_region
          %p466 = scmp.lt.s32.totalorder %s27, 2
          %s467 = scalar_select %p466, %s27, 2
          %s468 = scalar_lea.vmem %s12, %s467
        $region68: #{tpu_custom_call.1} parent=43 // pred_fallthru
          _
      $region44: #{tpu_custom_call.1} parent=5 // pred_fallthru
        _
      %p469 = scmp.le.s32.totalorder 1, %s20
      %p470 = scmp.lt.s32.totalorder %s20, 4
      %p471 = pnand %p469, %p470
      %p472 = pneg %p471
      // Predicated region
      $region69: #{tpu_custom_call.1} parent=5 // pred_check
        _
      $region70: #{tpu_custom_call.1} parent=5 // pred_check_branch
        %474 = sbr.rel (%p471) target = $region72
      $region71: #{tpu_custom_call.1} parent=5 // pred_region
        %s475 = ssub.s32 %s20, 1
        %p476 = pneg %p53
        %p477 = pneg %p50
        %s478 = smul.u32 16, %s30
        %p479 = scmp.lt.s32.totalorder %s478, 15
        %s480 = scalar_select %p479, %s478, 15
        %s481 = smul.addr %s480, 8
        %s482 = scalar_lea.vmem %s1, %s481
        %p483 = pneg %p79
        %p484 = pneg %p76
        %s485 = smul.u32 16, %s30
        %p486 = scmp.lt.s32.totalorder %s485, 15
        %s487 = scalar_select %p486, %s485, 15
        %s488 = smul.addr %s487, 8
        %s489 = scalar_lea.vmem %s2, %s488
        %p490 = pneg %p105
        %p491 = pneg %p102
        %s492 = smul.u32 16, %s30
        %p493 = scmp.lt.s32.totalorder %s492, 15
        %s494 = scalar_select %p493, %s492, 15
        %s495 = smul.addr %s494, 8
        %s496 = scalar_lea.vmem %s3, %s495
        %p497 = pneg %p131
        %p498 = pneg %p128
        %p499 = pneg %p152
        %p500 = pneg %p149
        %p501 = pneg %p173
        %p502 = pneg %p170
        %p503 = pneg %p194
        %p504 = pneg %p191
        %p505 = scmp.lt.s32.totalorder %s29, 2
        %s506 = scalar_select %p505, %s29, 2
        %s507 = scalar_lea.vmem %s7, %s506
        %p508 = pneg %p220
        %p509 = pneg %p217
        %p510 = scmp.lt.s32.totalorder %s29, 2
        %s511 = scalar_select %p510, %s29, 2
        %s512 = scalar_lea.vmem %s8, %s511
        %p513 = pneg %p246
        %p514 = pneg %p243
        %p515 = scmp.lt.s32.totalorder %s29, 2
        %s516 = scalar_select %p515, %s29, 2
        %s517 = smul.addr %s516, 16
        %s518 = smul.addr %s517, 4
        %s519 = scalar_lea.vmem %s9, %s518
        %p520 = pneg %p272
        %p521 = pneg %p269
        %p522 = scmp.lt.s32.totalorder %s29, 2
        %s523 = scalar_select %p522, %s29, 2
        %s524 = scalar_lea.vmem %s10, %s523
        %p525 = pneg %p298
        %p526 = pneg %p295
        %p527 = scmp.lt.s32.totalorder %s29, 2
        %s528 = scalar_select %p527, %s29, 2
        %s529 = smul.addr %s528, 16
        %s530 = smul.addr %s529, 4
        %s531 = scalar_lea.vmem %s11, %s530
        %p532 = pneg %p324
        %p533 = pneg %p321
        %p534 = scmp.lt.s32.totalorder %s29, 2
        %s535 = scalar_select %p534, %s29, 2
        %s536 = scalar_lea.vmem %s12, %s535
        %p537 = pneg %p350
        %p538 = pneg %p347
        %p539 = pneg %p371
        %p540 = pneg %p368
        %s541 = smul.u32 16, %s30
        %p542 = scmp.lt.s32.totalorder %s541, 15
        %s543 = scalar_select %p542, %s541, 15
        %s544 = smul.addr %s543, 8
        %s545 = scalar_lea.vmem %s1, %s544
        %s546 = smul.u32 16, %s30
        %s547 = smul.u32 16, %s30
        %p548 = scmp.lt.s32.totalorder %s547, 15
        %s549 = scalar_select %p548, %s547, 15
        %s550 = smul.addr %s549, 8
        %s551 = scalar_lea.vmem %s2, %s550
        %s552 = smul.u32 16, %s30
        %s553 = smul.u32 16, %s30
        %p554 = scmp.lt.s32.totalorder %s553, 15
        %s555 = scalar_select %p554, %s553, 15
        %s556 = smul.addr %s555, 8
        %s557 = scalar_lea.vmem %s3, %s556
        %s558 = smul.u32 16, %s30
        %p559 = scmp.lt.s32.totalorder %s29, 2
        %s560 = scalar_select %p559, %s29, 2
        %s561 = scalar_lea.vmem %s7, %s560
        %p562 = scmp.lt.s32.totalorder %s29, 2
        %s563 = scalar_select %p562, %s29, 2
        %s564 = scalar_lea.vmem %s8, %s563
        %p565 = scmp.lt.s32.totalorder %s29, 2
        %s566 = scalar_select %p565, %s29, 2
        %s567 = smul.addr %s566, 16
        %s568 = smul.addr %s567, 4
        %s569 = scalar_lea.vmem %s9, %s568
        %p570 = scmp.lt.s32.totalorder %s29, 2
        %s571 = scalar_select %p570, %s29, 2
        %s572 = scalar_lea.vmem %s10, %s571
        %p573 = scmp.lt.s32.totalorder %s29, 2
        %s574 = scalar_select %p573, %s29, 2
        %s575 = smul.addr %s574, 16
        %s576 = smul.addr %s575, 4
        %s577 = scalar_lea.vmem %s11, %s576
        %p578 = scmp.lt.s32.totalorder %s29, 2
        %s579 = scalar_select %p578, %s29, 2
        %s580 = scalar_lea.vmem %s12, %s579
        %p582 = scmp.eq.s32.totalorder %s29, 0
        %p583 = scmp.eq.s32.totalorder %s30, 0
        %p584 = pnand %p582, %p583
        %p585 = pneg %p584
        // Predicated region
        $region73: #{tpu_custom_call.1} parent=71 // pred_check
          _
        $region74: #{tpu_custom_call.1} parent=71 // pred_check_branch
          %587 = sbr.rel (%p584) target = $region76
        $region75: #{tpu_custom_call.1} parent=71 // pred_region
          %v588 = vld [vmem:[%s0] sm:$0xff]
          %v589 = vld [vmem:[%s0 + $0x8] sm:$0xff]
          %v590 = vld [vmem:[%s0 + $0x10] sm:$0xff]
          %v591 = vld [vmem:[%s0 + $0x18] sm:$0xff]
          %v592 = vld [vmem:[%s0 + $0x20] sm:$0xff]
          %v593 = vld [vmem:[%s0 + $0x28] sm:$0xff]
          %v594 = vld [vmem:[%s0 + $0x30] sm:$0xff]
          %v595 = vld [vmem:[%s0 + $0x38] sm:$0xff]
          %v596 = vld [vmem:[%s0 + $0x40] sm:$0xff]
          %v597 = vld [vmem:[%s0 + $0x48] sm:$0xff]
          %v598 = vld [vmem:[%s0 + $0x50] sm:$0xff]
          %v599 = vld [vmem:[%s0 + $0x58] sm:$0xff]
          %v600 = vld [vmem:[%s0 + $0x60] sm:$0xff]
          %v601 = vld [vmem:[%s0 + $0x68] sm:$0xff]
          %v602 = vld [vmem:[%s0 + $0x70] sm:$0xff]
          %v603 = vld [vmem:[%s0 + $0x78] sm:$0xff]
          %v604 = vpack.c.bf16 %v589, %v588
          %v605 = vpack.c.bf16 %v591, %v590
          %v606 = vpack.c.bf16 %v593, %v592
          %v607 = vpack.c.bf16 %v595, %v594
          %v608 = vpack.c.bf16 %v597, %v596
          %v609 = vpack.c.bf16 %v599, %v598
          %v610 = vpack.c.bf16 %v601, %v600
          %v611 = vpack.c.bf16 %v603, %v602
          %v612 = vld [vmem:[%s5] sm:$0xf]
          %v613 = vld [vmem:[%s6] sm:$0x1]
          %v615 = vlaneseq
          %v616 = vshrl.u32 %v615, 7
          %v617 = vsub.s32 0, %v616
          %v618 = vrot.slane %v613, %v617
          %vm620 = vcmask 64512
          %v622 = vsel %vm620, %v604, 0
          %v625 = vsel %vm620, %v605, 0
          %v628 = vsel %vm620, %v606, 0
          %v631 = vsel %vm620, %v607, 0
          %v634 = vsel %vm620, %v608, 0
          %v637 = vsel %vm620, %v609, 0
          %v640 = vsel %vm620, %v610, 0
          %v643 = vsel %vm620, %v611, 0
          %vm645 = vcmask 1043456
          %v647 = vsel %vm645, %v612, 0
          %649 = vmatprep.subr.bf16.mxu0 0
          %650 = vmatpush1.bf16.msra.mxu0 %v647
          %651 = vmatprep.subr.bf16.mxu0 0
          %652 = vmatpush1.bf16.msra.mxu0 0
          %653 = vmatprep.subr.bf16.mxu0 0
          %654 = vmatpush1.bf16.msra.mxu0 0
          %655 = vmatprep.subr.bf16.mxu0 0
          %656 = vmatpush1.bf16.msra.mxu0 0
          %657 = vmatprep.subr.bf16.mxu0 0
          %658 = vmatpush1.bf16.msra.mxu0 0
          %659 = vmatprep.subr.bf16.mxu0 0
          %660 = vmatpush1.bf16.msra.mxu0 0
          %661 = vmatprep.subr.bf16.mxu0 0
          %662 = vmatpush1.bf16.msra.mxu0 0
          %663 = vmatprep.subr.bf16.mxu0 0
          %664 = vmatpush1.bf16.msra.mxu0 0
          %665 = vmatprep.subr.bf16.mxu0 0
          %666 = vmatpush1.bf16.msra.mxu0 0
          %667 = vmatprep.subr.bf16.mxu0 0
          %668 = vmatpush1.bf16.msra.mxu0 0
          %669 = vmatprep.subr.bf16.mxu0 0
          %670 = vmatpush1.bf16.msra.mxu0 0
          %671 = vmatprep.subr.bf16.mxu0 0
          %672 = vmatpush1.bf16.msra.mxu0 0
          %673 = vmatprep.subr.bf16.mxu0 0
          %674 = vmatpush1.bf16.msra.mxu0 0
          %675 = vmatprep.subr.bf16.mxu0 0
          %676 = vmatpush1.bf16.msra.mxu0 0
          %677 = vmatprep.subr.bf16.mxu0 0
          %678 = vmatpush1.bf16.msra.mxu0 0
          %679 = vmatprep.subr.bf16.mxu0 0
          %680 = vmatpush1.bf16.msra.mxu0 0
          %681 = vmatprep.mubr.bf16.mxu0 0
          %682 = vmatmul.mubr.bf16.gmra.mrb[0].mxu0 %v622
          %v683 = vpop.f32.mrb[0].mxu0
          %v684 = vadd.f32 %v618, %v683
          %v685 = vpop.f32.mrb[0].mxu0
          %v686 = vpop.f32.mrb[0].mxu0
          %v687 = vadd.f32 %v618, %v686
          %v688 = vpop.f32.mrb[0].mxu0
          %689 = vmatprep.mubr.bf16.mxu0 0
          %690 = vmatmul.mubr.bf16.gmra.mrb[0].mxu0 %v625
          %v691 = vpop.f32.mrb[0].mxu0
          %v692 = vadd.f32 %v618, %v691
          %v693 = vpop.f32.mrb[0].mxu0
          %v694 = vpop.f32.mrb[0].mxu0
          %v695 = vadd.f32 %v618, %v694
          %v696 = vpop.f32.mrb[0].mxu0
          %697 = vmatprep.mubr.bf16.mxu0 0
          %698 = vmatmul.mubr.bf16.gmra.mrb[0].mxu0 %v628
          %v699 = vpop.f32.mrb[0].mxu0
          %v700 = vadd.f32 %v618, %v699
          %v701 = vpop.f32.mrb[0].mxu0
          %v702 = vpop.f32.mrb[0].mxu0
          %v703 = vadd.f32 %v618, %v702
          %v704 = vpop.f32.mrb[0].mxu0
          %705 = vmatprep.mubr.bf16.mxu0 0
          %706 = vmatmul.mubr.bf16.gmra.mrb[0].mxu0 %v631
          %v707 = vpop.f32.mrb[0].mxu0
          %v708 = vadd.f32 %v618, %v707
          %v709 = vpop.f32.mrb[0].mxu0
          %v710 = vpop.f32.mrb[0].mxu0
          %v711 = vadd.f32 %v618, %v710
          %v712 = vpop.f32.mrb[0].mxu0
          %713 = vmatprep.mubr.bf16.mxu0 0
          %714 = vmatmul.mubr.bf16.gmra.mrb[0].mxu0 %v634
          %v715 = vpop.f32.mrb[0].mxu0
          %v716 = vadd.f32 %v618, %v715
          %v717 = vpop.f32.mrb[0].mxu0
          %v718 = vpop.f32.mrb[0].mxu0
          %v719 = vadd.f32 %v618, %v718
          %v720 = vpop.f32.mrb[0].mxu0
          %721 = vmatprep.mubr.bf16.mxu0 0
          %722 = vmatmul.mubr.bf16.gmra.mrb[0].mxu0 %v637
          %v723 = vpop.f32.mrb[0].mxu0
          %v724 = vadd.f32 %v618, %v723
          %v725 = vpop.f32.mrb[0].mxu0
          %v726 = vpop.f32.mrb[0].mxu0
          %v727 = vadd.f32 %v618, %v726
          %v728 = vpop.f32.mrb[0].mxu0
          %729 = vmatprep.mubr.bf16.mxu0 0
          %730 = vmatmul.mubr.bf16.gmra.mrb[0].mxu0 %v640
          %v731 = vpop.f32.mrb[0].mxu0
          %v732 = vadd.f32 %v618, %v731
          %v733 = vpop.f32.mrb[0].mxu0
          %v734 = vpop.f32.mrb[0].mxu0
          %v735 = vadd.f32 %v618, %v734
          %v736 = vpop.f32.mrb[0].mxu0
          %737 = vmatprep.mubr.bf16.mxu0 0
          %738 = vmatmul.mubr.bf16.gmra.mrb[0].mxu0 %v643
          %v739 = vpop.f32.mrb[0].mxu0
          %v740 = vadd.f32 %v618, %v739
          %v741 = vpop.f32.mrb[0].mxu0
          %v742 = vpop.f32.mrb[0].mxu0
          %v743 = vadd.f32 %v618, %v742
          %v744 = vpop.f32.mrb[0].mxu0
          %745 = vdwg.mxu0
          %746 = vst [vmem:[#allocation2] sm:$0xff] %v684
          %747 = vst [vmem:[#allocation2 + $0x8] sm:$0xff] %v687
          %748 = vst [vmem:[#allocation2 + $0x10] sm:$0xff] %v692
          %749 = vst [vmem:[#allocation2 + $0x18] sm:$0xff] %v695
          %750 = vst [vmem:[#allocation2 + $0x20] sm:$0xff] %v700
          %751 = vst [vmem:[#allocation2 + $0x28] sm:$0xff] %v703
          %752 = vst [vmem:[#allocation2 + $0x30] sm:$0xff] %v708
          %753 = vst [vmem:[#allocation2 + $0x38] sm:$0xff] %v711
          %754 = vst [vmem:[#allocation2 + $0x40] sm:$0xff] %v716
          %755 = vst [vmem:[#allocation2 + $0x48] sm:$0xff] %v719
          %756 = vst [vmem:[#allocation2 + $0x50] sm:$0xff] %v724
          %757 = vst [vmem:[#allocation2 + $0x58] sm:$0xff] %v727
          %758 = vst [vmem:[#allocation2 + $0x60] sm:$0xff] %v732
          %759 = vst [vmem:[#allocation2 + $0x68] sm:$0xff] %v735
          %760 = vst [vmem:[#allocation2 + $0x70] sm:$0xff] %v740
          %761 = vst [vmem:[#allocation2 + $0x78] sm:$0xff] %v743
          %v762 = vpack.c.bf16 %v687, %v684
          %v763 = vpack.c.bf16 %v695, %v692
          %v764 = vpack.c.bf16 %v703, %v700
          %v765 = vpack.c.bf16 %v711, %v708
          %v766 = vpack.c.bf16 %v719, %v716
          %v767 = vpack.c.bf16 %v727, %v724
          %v768 = vpack.c.bf16 %v735, %v732
          %v769 = vpack.c.bf16 %v743, %v740
          %770 = vst [vmem:[#allocation3] sm:$0xff] %v762
          %771 = vst [vmem:[#allocation3 + $0x8] sm:$0xff] %v763
          %772 = vst [vmem:[#allocation3 + $0x10] sm:$0xff] %v764
          %773 = vst [vmem:[#allocation3 + $0x18] sm:$0xff] %v765
          %774 = vst [vmem:[#allocation3 + $0x20] sm:$0xff] %v766
          %775 = vst [vmem:[#allocation3 + $0x28] sm:$0xff] %v767
          %776 = vst [vmem:[#allocation3 + $0x30] sm:$0xff] %v768
          %777 = vst [vmem:[#allocation3 + $0x38] sm:$0xff] %v769
        $region76: #{tpu_custom_call.1} parent=71 // pred_fallthru
          _
        // Predicated region
        $region77: #{tpu_custom_call.1} parent=71 // pred_check
          %p778 = pneg %p583
        $region78: #{tpu_custom_call.1} parent=71 // pred_check_branch
          %780 = sbr.rel (%p778) target = $region80
        $region79: #{tpu_custom_call.1} parent=71 // pred_region
          %781 = vst [vmem:[#allocation4] sm:$0xff] 0.0
          %782 = vst [vmem:[#allocation4 + $0x8] sm:$0xff] 0.0
          %783 = vst [vmem:[#allocation4 + $0x10] sm:$0xff] 0.0
          %784 = vst [vmem:[#allocation4 + $0x18] sm:$0xff] 0.0
          %785 = vst [vmem:[#allocation4 + $0x20] sm:$0xff] 0.0
          %786 = vst [vmem:[#allocation4 + $0x28] sm:$0xff] 0.0
          %787 = vst [vmem:[#allocation4 + $0x30] sm:$0xff] 0.0
          %788 = vst [vmem:[#allocation4 + $0x38] sm:$0xff] 0.0
          %789 = vst [vmem:[#allocation4 + $0x40] sm:$0xff] 0.0
          %790 = vst [vmem:[#allocation4 + $0x48] sm:$0xff] 0.0
          %791 = vst [vmem:[#allocation4 + $0x50] sm:$0xff] 0.0
          %792 = vst [vmem:[#allocation4 + $0x58] sm:$0xff] 0.0
          %793 = vst [vmem:[#allocation4 + $0x60] sm:$0xff] 0.0
          %794 = vst [vmem:[#allocation4 + $0x68] sm:$0xff] 0.0
          %795 = vst [vmem:[#allocation4 + $0x70] sm:$0xff] 0.0
          %796 = vst [vmem:[#allocation4 + $0x78] sm:$0xff] 0.0
        $region80: #{tpu_custom_call.1} parent=71 // pred_fallthru
          _
        %v797 = vld [vmem:[%s545] sm:$0xff]
        %v798 = vld [vmem:[%s545 + $0x8] sm:$0xff]
        %v799 = vld [vmem:[%s545 + $0x10] sm:$0xff]
        %v800 = vld [vmem:[%s545 + $0x18] sm:$0xff]
        %v801 = vld [vmem:[%s545 + $0x20] sm:$0xff]
        %v802 = vld [vmem:[%s545 + $0x28] sm:$0xff]
        %v803 = vld [vmem:[%s545 + $0x30] sm:$0xff]
        %v804 = vld [vmem:[%s545 + $0x38] sm:$0xff]
        %v805 = vld [vmem:[%s545 + $0x40] sm:$0xff]
        %v806 = vld [vmem:[%s545 + $0x48] sm:$0xff]
        %v807 = vld [vmem:[%s545 + $0x50] sm:$0xff]
        %v808 = vld [vmem:[%s545 + $0x58] sm:$0xff]
        %v809 = vld [vmem:[%s545 + $0x60] sm:$0xff]
        %v810 = vld [vmem:[%s545 + $0x68] sm:$0xff]
        %v811 = vld [vmem:[%s545 + $0x70] sm:$0xff]
        %v812 = vld [vmem:[%s545 + $0x78] sm:$0xff]
        %v813 = vld [vmem:[%s561] sm:$0x1]
        %815 = vset.pattern.permute.xlu0 0
        %816 = vperm.xlu0 %815, %v797
        %v817 = vpop.permute.xlu0 %816
        %820 = vset.pattern.permute.xlu0 0
        %821 = vperm.xlu0 %820, %v798
        %v822 = vpop.permute.xlu0 %821
        %825 = vset.pattern.permute.xlu0 0
        %826 = vperm.xlu0 %825, %v799
        %v827 = vpop.permute.xlu0 %826
        %830 = vset.pattern.permute.xlu0 0
        %831 = vperm.xlu0 %830, %v800
        %v832 = vpop.permute.xlu0 %831
        %835 = vset.pattern.permute.xlu0 0
        %836 = vperm.xlu0 %835, %v801
        %v837 = vpop.permute.xlu0 %836
        %840 = vset.pattern.permute.xlu0 0
        %841 = vperm.xlu0 %840, %v802
        %v842 = vpop.permute.xlu0 %841
        %845 = vset.pattern.permute.xlu0 0
        %846 = vperm.xlu0 %845, %v803
        %v847 = vpop.permute.xlu0 %846
        %850 = vset.pattern.permute.xlu0 0
        %851 = vperm.xlu0 %850, %v804
        %v852 = vpop.permute.xlu0 %851
        %855 = vset.pattern.permute.xlu0 0
        %856 = vperm.xlu0 %855, %v805
        %v857 = vpop.permute.xlu0 %856
        %860 = vset.pattern.permute.xlu0 0
        %861 = vperm.xlu0 %860, %v806
        %v862 = vpop.permute.xlu0 %861
        %865 = vset.pattern.permute.xlu0 0
        %866 = vperm.xlu0 %865, %v807
        %v867 = vpop.permute.xlu0 %866
        %870 = vset.pattern.permute.xlu0 0
        %871 = vperm.xlu0 %870, %v808
        %v872 = vpop.permute.xlu0 %871
        %875 = vset.pattern.permute.xlu0 0
        %876 = vperm.xlu0 %875, %v809
        %v877 = vpop.permute.xlu0 %876
        %880 = vset.pattern.permute.xlu0 0
        %881 = vperm.xlu0 %880, %v810
        %v882 = vpop.permute.xlu0 %881
        %885 = vset.pattern.permute.xlu0 0
        %886 = vperm.xlu0 %885, %v811
        %v887 = vpop.permute.xlu0 %886
        %890 = vset.pattern.permute.xlu0 0
        %891 = vperm.xlu0 %890, %v812
        %v892 = vpop.permute.xlu0 %891
        %v895 = vlaneseq
        %v896 = vshrl.u32 %v895, 7
        %v897 = vsub.s32 0, %v896
        %v898 = vrot.slane %v813, %v897
        %v900 = vmul.f32 %v817, %v898
        %v901 = vmul.f32 %v822, %v898
        %v902 = vmul.f32 %v827, %v898
        %v903 = vmul.f32 %v832, %v898
        %v904 = vmul.f32 %v837, %v898
        %v905 = vmul.f32 %v842, %v898
        %v906 = vmul.f32 %v847, %v898
        %v907 = vmul.f32 %v852, %v898
        %v908 = vmul.f32 %v857, %v898
        %v909 = vmul.f32 %v862, %v898
        %v910 = vmul.f32 %v867, %v898
        %v911 = vmul.f32 %v872, %v898
        %v912 = vmul.f32 %v877, %v898
        %v913 = vmul.f32 %v882, %v898
        %v914 = vmul.f32 %v887, %v898
        %v915 = vmul.f32 %v892, %v898
        %v916 = vld [vmem:[%s564] sm:$0x1]
        %v918 = vlaneseq
        %v919 = vshrl.u32 %v918, 7
        %v920 = vsub.s32 0, %v919
        %v921 = vrot.slane %v916, %v920
        %v923 = vadd.f32 %v900, %v921
        %v924 = vadd.f32 %v901, %v921
        %v925 = vadd.f32 %v902, %v921
        %v926 = vadd.f32 %v903, %v921
        %v927 = vadd.f32 %v904, %v921
        %v928 = vadd.f32 %v905, %v921
        %v929 = vadd.f32 %v906, %v921
        %v930 = vadd.f32 %v907, %v921
        %v931 = vadd.f32 %v908, %v921
        %v932 = vadd.f32 %v909, %v921
        %v933 = vadd.f32 %v910, %v921
        %v934 = vadd.f32 %v911, %v921
        %v935 = vadd.f32 %v912, %v921
        %v936 = vadd.f32 %v913, %v921
        %v937 = vadd.f32 %v914, %v921
        %v938 = vadd.f32 %v915, %v921
        %v939 = vlaneseq
        %v940 = vand.u32 %v939, 127
        %v941 = vld [vmem:[%s551] sm:$0xff]
        %v942 = vld [vmem:[%s551 + $0x8] sm:$0xff]
        %v943 = vld [vmem:[%s551 + $0x10] sm:$0xff]
        %v944 = vld [vmem:[%s551 + $0x18] sm:$0xff]
        %v945 = vld [vmem:[%s551 + $0x20] sm:$0xff]
        %v946 = vld [vmem:[%s551 + $0x28] sm:$0xff]
        %v947 = vld [vmem:[%s551 + $0x30] sm:$0xff]
        %v948 = vld [vmem:[%s551 + $0x38] sm:$0xff]
        %v949 = vld [vmem:[%s551 + $0x40] sm:$0xff]
        %v950 = vld [vmem:[%s551 + $0x48] sm:$0xff]
        %v951 = vld [vmem:[%s551 + $0x50] sm:$0xff]
        %v952 = vld [vmem:[%s551 + $0x58] sm:$0xff]
        %v953 = vld [vmem:[%s551 + $0x60] sm:$0xff]
        %v954 = vld [vmem:[%s551 + $0x68] sm:$0xff]
        %v955 = vld [vmem:[%s551 + $0x70] sm:$0xff]
        %v956 = vld [vmem:[%s551 + $0x78] sm:$0xff]
        %957 = vset.pattern.permute.xlu0 0
        %958 = vperm.xlu0 %957, %v941
        %v959 = vpop.permute.xlu0 %958
        %960 = vset.pattern.permute.xlu0 0
        %961 = vperm.xlu0 %960, %v942
        %v962 = vpop.permute.xlu0 %961
        %963 = vset.pattern.permute.xlu0 0
        %964 = vperm.xlu0 %963, %v943
        %v965 = vpop.permute.xlu0 %964
        %966 = vset.pattern.permute.xlu0 0
        %967 = vperm.xlu0 %966, %v944
        %v968 = vpop.permute.xlu0 %967
        %969 = vset.pattern.permute.xlu0 0
        %970 = vperm.xlu0 %969, %v945
        %v971 = vpop.permute.xlu0 %970
        %972 = vset.pattern.permute.xlu0 0
        %973 = vperm.xlu0 %972, %v946
        %v974 = vpop.permute.xlu0 %973
        %975 = vset.pattern.permute.xlu0 0
        %976 = vperm.xlu0 %975, %v947
        %v977 = vpop.permute.xlu0 %976
        %978 = vset.pattern.permute.xlu0 0
        %979 = vperm.xlu0 %978, %v948
        %v980 = vpop.permute.xlu0 %979
        %981 = vset.pattern.permute.xlu0 0
        %982 = vperm.xlu0 %981, %v949
        %v983 = vpop.permute.xlu0 %982
        %984 = vset.pattern.permute.xlu0 0
        %985 = vperm.xlu0 %984, %v950
        %v986 = vpop.permute.xlu0 %985
        %987 = vset.pattern.permute.xlu0 0
        %988 = vperm.xlu0 %987, %v951
        %v989 = vpop.permute.xlu0 %988
        %990 = vset.pattern.permute.xlu0 0
        %991 = vperm.xlu0 %990, %v952
        %v992 = vpop.permute.xlu0 %991
        %993 = vset.pattern.permute.xlu0 0
        %994 = vperm.xlu0 %993, %v953
        %v995 = vpop.permute.xlu0 %994
        %996 = vset.pattern.permute.xlu0 0
        %997 = vperm.xlu0 %996, %v954
        %v998 = vpop.permute.xlu0 %997
        %999 = vset.pattern.permute.xlu0 0
        %1000 = vperm.xlu0 %999, %v955
        %v1001 = vpop.permute.xlu0 %1000
        %1002 = vset.pattern.permute.xlu0 0
        %1003 = vperm.xlu0 %1002, %v956
        %v1004 = vpop.permute.xlu0 %1003
        %vm1005 = vcmp.eq.s32.totalorder %v959, %v940
        %vm1006 = vcmp.eq.s32.totalorder %v962, %v940
        %vm1007 = vcmp.eq.s32.totalorder %v965, %v940
        %vm1008 = vcmp.eq.s32.totalorder %v968, %v940
        %vm1009 = vcmp.eq.s32.totalorder %v971, %v940
        %vm1010 = vcmp.eq.s32.totalorder %v974, %v940
        %vm1011 = vcmp.eq.s32.totalorder %v977, %v940
        %vm1012 = vcmp.eq.s32.totalorder %v980, %v940
        %vm1013 = vcmp.eq.s32.totalorder %v983, %v940
        %vm1014 = vcmp.eq.s32.totalorder %v986, %v940
        %vm1015 = vcmp.eq.s32.totalorder %v989, %v940
        %vm1016 = vcmp.eq.s32.totalorder %v992, %v940
        %vm1017 = vcmp.eq.s32.totalorder %v995, %v940
        %vm1018 = vcmp.eq.s32.totalorder %v998, %v940
        %vm1019 = vcmp.eq.s32.totalorder %v1001, %v940
        %vm1020 = vcmp.eq.s32.totalorder %v1004, %v940
        %v1021 = vsel %vm1005, 1, 0
        %v1022 = vsel %vm1006, 1, 0
        %v1023 = vsel %vm1007, 1, 0
        %v1024 = vsel %vm1008, 1, 0
        %v1025 = vsel %vm1009, 1, 0
        %v1026 = vsel %vm1010, 1, 0
        %v1027 = vsel %vm1011, 1, 0
        %v1028 = vsel %vm1012, 1, 0
        %v1029 = vsel %vm1013, 1, 0
        %v1030 = vsel %vm1014, 1, 0
        %v1031 = vsel %vm1015, 1, 0
        %v1032 = vsel %vm1016, 1, 0
        %v1033 = vsel %vm1017, 1, 0
        %v1034 = vsel %vm1018, 1, 0
        %v1035 = vsel %vm1019, 1, 0
        %v1036 = vsel %vm1020, 1, 0
        %v1037 = vcvt.s32.f32 %v1021
        %v1038 = vcvt.s32.f32 %v1022
        %v1039 = vcvt.s32.f32 %v1023
        %v1040 = vcvt.s32.f32 %v1024
        %v1041 = vcvt.s32.f32 %v1025
        %v1042 = vcvt.s32.f32 %v1026
        %v1043 = vcvt.s32.f32 %v1027
        %v1044 = vcvt.s32.f32 %v1028
        %v1045 = vcvt.s32.f32 %v1029
        %v1046 = vcvt.s32.f32 %v1030
        %v1047 = vcvt.s32.f32 %v1031
        %v1048 = vcvt.s32.f32 %v1032
        %v1049 = vcvt.s32.f32 %v1033
        %v1050 = vcvt.s32.f32 %v1034
        %v1051 = vcvt.s32.f32 %v1035
        %v1052 = vcvt.s32.f32 %v1036
        %v1053 = vpack.c.bf16 %v1038, %v1037
        %v1054 = vpack.c.bf16 %v1040, %v1039
        %v1055 = vpack.c.bf16 %v1042, %v1041
        %v1056 = vpack.c.bf16 %v1044, %v1043
        %v1057 = vpack.c.bf16 %v1046, %v1045
        %v1058 = vpack.c.bf16 %v1048, %v1047
        %v1059 = vpack.c.bf16 %v1050, %v1049
        %v1060 = vpack.c.bf16 %v1052, %v1051
        %v1061 = vld [vmem:[%s557] sm:$0xff]
        %v1062 = vld [vmem:[%s557 + $0x8] sm:$0xff]
        %v1063 = vld [vmem:[%s557 + $0x10] sm:$0xff]
        %v1064 = vld [vmem:[%s557 + $0x18] sm:$0xff]
        %v1065 = vld [vmem:[%s557 + $0x20] sm:$0xff]
        %v1066 = vld [vmem:[%s557 + $0x28] sm:$0xff]
        %v1067 = vld [vmem:[%s557 + $0x30] sm:$0xff]
        %v1068 = vld [vmem:[%s557 + $0x38] sm:$0xff]
        %v1069 = vld [vmem:[%s557 + $0x40] sm:$0xff]
        %v1070 = vld [vmem:[%s557 + $0x48] sm:$0xff]
        %v1071 = vld [vmem:[%s557 + $0x50] sm:$0xff]
        %v1072 = vld [vmem:[%s557 + $0x58] sm:$0xff]
        %v1073 = vld [vmem:[%s557 + $0x60] sm:$0xff]
        %v1074 = vld [vmem:[%s557 + $0x68] sm:$0xff]
        %v1075 = vld [vmem:[%s557 + $0x70] sm:$0xff]
        %v1076 = vld [vmem:[%s557 + $0x78] sm:$0xff]
        %1077 = vset.pattern.permute.xlu0 0
        %1078 = vperm.xlu0 %1077, %v1061
        %v1079 = vpop.permute.xlu0 %1078
        %1080 = vset.pattern.permute.xlu0 0
        %1081 = vperm.xlu0 %1080, %v1062
        %v1082 = vpop.permute.xlu0 %1081
        %1083 = vset.pattern.permute.xlu0 0
        %1084 = vperm.xlu0 %1083, %v1063
        %v1085 = vpop.permute.xlu0 %1084
        %1086 = vset.pattern.permute.xlu0 0
        %1087 = vperm.xlu0 %1086, %v1064
        %v1088 = vpop.permute.xlu0 %1087
        %1089 = vset.pattern.permute.xlu0 0
        %1090 = vperm.xlu0 %1089, %v1065
        %v1091 = vpop.permute.xlu0 %1090
        %1092 = vset.pattern.permute.xlu0 0
        %1093 = vperm.xlu0 %1092, %v1066
        %v1094 = vpop.permute.xlu0 %1093
        %1095 = vset.pattern.permute.xlu0 0
        %1096 = vperm.xlu0 %1095, %v1067
        %v1097 = vpop.permute.xlu0 %1096
        %1098 = vset.pattern.permute.xlu0 0
        %1099 = vperm.xlu0 %1098, %v1068
        %v1100 = vpop.permute.xlu0 %1099
        %1101 = vset.pattern.permute.xlu0 0
        %1102 = vperm.xlu0 %1101, %v1069
        %v1103 = vpop.permute.xlu0 %1102
        %1104 = vset.pattern.permute.xlu0 0
        %1105 = vperm.xlu0 %1104, %v1070
        %v1106 = vpop.permute.xlu0 %1105
        %1107 = vset.pattern.permute.xlu0 0
        %1108 = vperm.xlu0 %1107, %v1071
        %v1109 = vpop.permute.xlu0 %1108
        %1110 = vset.pattern.permute.xlu0 0
        %1111 = vperm.xlu0 %1110, %v1072
        %v1112 = vpop.permute.xlu0 %1111
        %1113 = vset.pattern.permute.xlu0 0
        %1114 = vperm.xlu0 %1113, %v1073
        %v1115 = vpop.permute.xlu0 %1114
        %1116 = vset.pattern.permute.xlu0 0
        %1117 = vperm.xlu0 %1116, %v1074
        %v1118 = vpop.permute.xlu0 %1117
        %1119 = vset.pattern.permute.xlu0 0
        %1120 = vperm.xlu0 %1119, %v1075
        %v1121 = vpop.permute.xlu0 %1120
        %1122 = vset.pattern.permute.xlu0 0
        %1123 = vperm.xlu0 %1122, %v1076
        %v1124 = vpop.permute.xlu0 %1123
        %vm1125 = vcmp.eq.s32.totalorder %v1079, %v940
        %vm1126 = vcmp.eq.s32.totalorder %v1082, %v940
        %vm1127 = vcmp.eq.s32.totalorder %v1085, %v940
        %vm1128 = vcmp.eq.s32.totalorder %v1088, %v940
        %vm1129 = vcmp.eq.s32.totalorder %v1091, %v940
        %vm1130 = vcmp.eq.s32.totalorder %v1094, %v940
        %vm1131 = vcmp.eq.s32.totalorder %v1097, %v940
        %vm1132 = vcmp.eq.s32.totalorder %v1100, %v940
        %vm1133 = vcmp.eq.s32.totalorder %v1103, %v940
        %vm1134 = vcmp.eq.s32.totalorder %v1106, %v940
        %vm1135 = vcmp.eq.s32.totalorder %v1109, %v940
        %vm1136 = vcmp.eq.s32.totalorder %v1112, %v940
        %vm1137 = vcmp.eq.s32.totalorder %v1115, %v940
        %vm1138 = vcmp.eq.s32.totalorder %v1118, %v940
        %vm1139 = vcmp.eq.s32.totalorder %v1121, %v940
        %vm1140 = vcmp.eq.s32.totalorder %v1124, %v940
        %v1141 = vsel %vm1125, 1, 0
        %v1142 = vsel %vm1126, 1, 0
        %v1143 = vsel %vm1127, 1, 0
        %v1144 = vsel %vm1128, 1, 0
        %v1145 = vsel %vm1129, 1, 0
        %v1146 = vsel %vm1130, 1, 0
        %v1147 = vsel %vm1131, 1, 0
        %v1148 = vsel %vm1132, 1, 0
        %v1149 = vsel %vm1133, 1, 0
        %v1150 = vsel %vm1134, 1, 0
        %v1151 = vsel %vm1135, 1, 0
        %v1152 = vsel %vm1136, 1, 0
        %v1153 = vsel %vm1137, 1, 0
        %v1154 = vsel %vm1138, 1, 0
        %v1155 = vsel %vm1139, 1, 0
        %v1156 = vsel %vm1140, 1, 0
        %v1157 = vcvt.s32.f32 %v1141
        %v1158 = vcvt.s32.f32 %v1142
        %v1159 = vcvt.s32.f32 %v1143
        %v1160 = vcvt.s32.f32 %v1144
        %v1161 = vcvt.s32.f32 %v1145
        %v1162 = vcvt.s32.f32 %v1146
        %v1163 = vcvt.s32.f32 %v1147
        %v1164 = vcvt.s32.f32 %v1148
        %v1165 = vcvt.s32.f32 %v1149
        %v1166 = vcvt.s32.f32 %v1150
        %v1167 = vcvt.s32.f32 %v1151
        %v1168 = vcvt.s32.f32 %v1152
        %v1169 = vcvt.s32.f32 %v1153
        %v1170 = vcvt.s32.f32 %v1154
        %v1171 = vcvt.s32.f32 %v1155
        %v1172 = vcvt.s32.f32 %v1156
        %v1173 = vpack.c.bf16 %v1158, %v1157
        %v1174 = vpack.c.bf16 %v1160, %v1159
        %v1175 = vpack.c.bf16 %v1162, %v1161
        %v1176 = vpack.c.bf16 %v1164, %v1163
        %v1177 = vpack.c.bf16 %v1166, %v1165
        %v1178 = vpack.c.bf16 %v1168, %v1167
        %v1179 = vpack.c.bf16 %v1170, %v1169
        %v1180 = vpack.c.bf16 %v1172, %v1171
        %v1181 = vld [vmem:[#allocation3] sm:$0xff]
        %v1182 = vld [vmem:[#allocation3 + $0x8] sm:$0xff]
        %v1183 = vld [vmem:[#allocation3 + $0x10] sm:$0xff]
        %v1184 = vld [vmem:[#allocation3 + $0x18] sm:$0xff]
        %v1185 = vld [vmem:[#allocation3 + $0x20] sm:$0xff]
        %v1186 = vld [vmem:[#allocation3 + $0x28] sm:$0xff]
        %v1187 = vld [vmem:[#allocation3 + $0x30] sm:$0xff]
        %v1188 = vld [vmem:[#allocation3 + $0x38] sm:$0xff]
        %1189 = vmatprep.subr.bf16.mxu0 0
        %1190 = vmatpush1.bf16.msra.mxu0 %v1181
        %1191 = vmatprep.subr.bf16.mxu0 0
        %1192 = vmatpush1.bf16.msra.mxu0 %v1182
        %1193 = vmatprep.subr.bf16.mxu0 0
        %1194 = vmatpush1.bf16.msra.mxu0 %v1183
        %1195 = vmatprep.subr.bf16.mxu0 0
        %1196 = vmatpush1.bf16.msra.mxu0 %v1184
        %1197 = vmatprep.subr.bf16.mxu0 0
        %1198 = vmatpush1.bf16.msra.mxu0 %v1185
        %1199 = vmatprep.subr.bf16.mxu0 0
        %1200 = vmatpush1.bf16.msra.mxu0 %v1186
        %1201 = vmatprep.subr.bf16.mxu0 0
        %1202 = vmatpush1.bf16.msra.mxu0 %v1187
        %1203 = vmatprep.subr.bf16.mxu0 0
        %1204 = vmatpush1.bf16.msra.mxu0 %v1188
        %1205 = vmatprep.subr.bf16.mxu0 0
        %1206 = vmatpush1.bf16.msra.mxu0 0
        %1207 = vmatprep.subr.bf16.mxu0 0
        %1208 = vmatpush1.bf16.msra.mxu0 0
        %1209 = vmatprep.subr.bf16.mxu0 0
        %1210 = vmatpush1.bf16.msra.mxu0 0
        %1211 = vmatprep.subr.bf16.mxu0 0
        %1212 = vmatpush1.bf16.msra.mxu0 0
        %1213 = vmatprep.subr.bf16.mxu0 0
        %1214 = vmatpush1.bf16.msra.mxu0 0
        %1215 = vmatprep.subr.bf16.mxu0 0
        %1216 = vmatpush1.bf16.msra.mxu0 0
        %1217 = vmatprep.subr.bf16.mxu0 0
        %1218 = vmatpush1.bf16.msra.mxu0 0
        %1219 = vmatprep.subr.bf16.mxu0 0
        %1220 = vmatpush1.bf16.msra.mxu0 0
        %1221 = vmatprep.mubr.bf16.mxu0 0
        %1222 = vmatmul.mubr.bf16.gmra.mrb[0].mxu0 %v1053
        %v1223 = vpop.f32.mrb[0].mxu0
        %v1224 = vadd.f32 %v923, %v1223
        %v1225 = vpop.f32.mrb[0].mxu0
        %v1226 = vpop.f32.mrb[0].mxu0
        %v1227 = vadd.f32 %v924, %v1226
        %v1228 = vpop.f32.mrb[0].mxu0
        %1229 = vmatprep.mubr.bf16.mxu0 0
        %1230 = vmatmul.mubr.bf16.gmra.mrb[0].mxu0 %v1054
        %v1231 = vpop.f32.mrb[0].mxu0
        %v1232 = vadd.f32 %v925, %v1231
        %v1233 = vpop.f32.mrb[0].mxu0
        %v1234 = vpop.f32.mrb[0].mxu0
        %v1235 = vadd.f32 %v926, %v1234
        %v1236 = vpop.f32.mrb[0].mxu0
        %1237 = vmatprep.mubr.bf16.mxu0 0
        %1238 = vmatmul.mubr.bf16.gmra.mrb[0].mxu0 %v1055
        %v1239 = vpop.f32.mrb[0].mxu0
        %v1240 = vadd.f32 %v927, %v1239
        %v1241 = vpop.f32.mrb[0].mxu0
        %v1242 = vpop.f32.mrb[0].mxu0
        %v1243 = vadd.f32 %v928, %v1242
        %v1244 = vpop.f32.mrb[0].mxu0
        %1245 = vmatprep.mubr.bf16.mxu0 0
        %1246 = vmatmul.mubr.bf16.gmra.mrb[0].mxu0 %v1056
        %v1247 = vpop.f32.mrb[0].mxu0
        %v1248 = vadd.f32 %v929, %v1247
        %v1249 = vpop.f32.mrb[0].mxu0
        %v1250 = vpop.f32.mrb[0].mxu0
        %v1251 = vadd.f32 %v930, %v1250
        %v1252 = vpop.f32.mrb[0].mxu0
        %1253 = vmatprep.mubr.bf16.mxu0 0
        %1254 = vmatmul.mubr.bf16.gmra.mrb[0].mxu0 %v1057
        %v1255 = vpop.f32.mrb[0].mxu0
        %v1256 = vadd.f32 %v931, %v1255
        %v1257 = vpop.f32.mrb[0].mxu0
        %v1258 = vpop.f32.mrb[0].mxu0
        %v1259 = vadd.f32 %v932, %v1258
        %v1260 = vpop.f32.mrb[0].mxu0
        %1261 = vmatprep.mubr.bf16.mxu0 0
        %1262 = vmatmul.mubr.bf16.gmra.mrb[0].mxu0 %v1058
        %v1263 = vpop.f32.mrb[0].mxu0
        %v1264 = vadd.f32 %v933, %v1263
        %v1265 = vpop.f32.mrb[0].mxu0
        %v1266 = vpop.f32.mrb[0].mxu0
        %v1267 = vadd.f32 %v934, %v1266
        %v1268 = vpop.f32.mrb[0].mxu0
        %1269 = vmatprep.mubr.bf16.mxu0 0
        %1270 = vmatmul.mubr.bf16.gmra.mrb[0].mxu0 %v1059
        %v1271 = vpop.f32.mrb[0].mxu0
        %v1272 = vadd.f32 %v935, %v1271
        %v1273 = vpop.f32.mrb[0].mxu0
        %v1274 = vpop.f32.mrb[0].mxu0
        %v1275 = vadd.f32 %v936, %v1274
        %v1276 = vpop.f32.mrb[0].mxu0
        %1277 = vmatprep.mubr.bf16.mxu0 0
        %1278 = vmatmul.mubr.bf16.gmra.mrb[0].mxu0 %v1060
        %v1279 = vpop.f32.mrb[0].mxu0
        %v1280 = vadd.f32 %v937, %v1279
        %v1281 = vpop.f32.mrb[0].mxu0
        %v1282 = vpop.f32.mrb[0].mxu0
        %v1283 = vadd.f32 %v938, %v1282
        %v1284 = vpop.f32.mrb[0].mxu0
        %1285 = vdwg.mxu0
        %v1286 = vmax.f32 %v1224, 0.0
        %v1287 = vmax.f32 %v1227, 0.0
        %v1288 = vmax.f32 %v1232, 0.0
        %v1289 = vmax.f32 %v1235, 0.0
        %v1290 = vmax.f32 %v1240, 0.0
        %v1291 = vmax.f32 %v1243, 0.0
        %v1292 = vmax.f32 %v1248, 0.0
        %v1293 = vmax.f32 %v1251, 0.0
        %v1294 = vmax.f32 %v1256, 0.0
        %v1295 = vmax.f32 %v1259, 0.0
        %v1296 = vmax.f32 %v1264, 0.0
        %v1297 = vmax.f32 %v1267, 0.0
        %v1298 = vmax.f32 %v1272, 0.0
        %v1299 = vmax.f32 %v1275, 0.0
        %v1300 = vmax.f32 %v1280, 0.0
        %v1301 = vmax.f32 %v1283, 0.0
        %v1302 = vpack.c.bf16 %v1287, %v1286
        %v1303 = vpack.c.bf16 %v1289, %v1288
        %v1304 = vpack.c.bf16 %v1291, %v1290
        %v1305 = vpack.c.bf16 %v1293, %v1292
        %v1306 = vpack.c.bf16 %v1295, %v1294
        %v1307 = vpack.c.bf16 %v1297, %v1296
        %v1308 = vpack.c.bf16 %v1299, %v1298
        %v1309 = vpack.c.bf16 %v1301, %v1300
        %v1310 = vld [vmem:[#allocation4] sm:$0xff]
        %v1311 = vld [vmem:[#allocation4 + $0x8] sm:$0xff]
        %v1312 = vld [vmem:[#allocation4 + $0x10] sm:$0xff]
        %v1313 = vld [vmem:[#allocation4 + $0x18] sm:$0xff]
        %v1314 = vld [vmem:[#allocation4 + $0x20] sm:$0xff]
        %v1315 = vld [vmem:[#allocation4 + $0x28] sm:$0xff]
        %v1316 = vld [vmem:[#allocation4 + $0x30] sm:$0xff]
        %v1317 = vld [vmem:[#allocation4 + $0x38] sm:$0xff]
        %v1318 = vld [vmem:[#allocation4 + $0x40] sm:$0xff]
        %v1319 = vld [vmem:[#allocation4 + $0x48] sm:$0xff]
        %v1320 = vld [vmem:[#allocation4 + $0x50] sm:$0xff]
        %v1321 = vld [vmem:[#allocation4 + $0x58] sm:$0xff]
        %v1322 = vld [vmem:[#allocation4 + $0x60] sm:$0xff]
        %v1323 = vld [vmem:[#allocation4 + $0x68] sm:$0xff]
        %v1324 = vld [vmem:[#allocation4 + $0x70] sm:$0xff]
        %v1325 = vld [vmem:[#allocation4 + $0x78] sm:$0xff]
        %1326 = vxpose.xlu0.c.b16.start [1/8] %v1173, 128
        %1327 = vxpose.xlu0.c.b16.cont [2/8] %v1174, 128
        %1328 = vxpose.xlu0.c.b16.cont [3/8] %v1175, 128
        %1329 = vxpose.xlu0.c.b16.cont [4/8] %v1176, 128
        %1330 = vxpose.xlu0.c.b16.cont [5/8] %v1177, 128
        %1331 = vxpose.xlu0.c.b16.cont [6/8] %v1178, 128
        %1332 = vxpose.xlu0.c.b16.cont [7/8] %v1179, 128
        %1333 = vxpose.xlu0.c.b16.end [8/8] %v1180, 128
        %v1334 = vpop.trf.xlu0
        %v1335 = vpop.trf.xlu0
        %v1336 = vpop.trf.xlu0
        %v1337 = vpop.trf.xlu0
        %v1338 = vpop.trf.xlu0
        %v1339 = vpop.trf.xlu0
        %v1340 = vpop.trf.xlu0
        %v1341 = vpop.trf.xlu0
        %1342 = vmatprep.subr.bf16.mxu0 0
        %1343 = vmatpush1.bf16.msra.mxu0 %v1302
        %1344 = vmatprep.subr.bf16.mxu0 0
        %1345 = vmatpush1.bf16.msra.mxu0 %v1303
        %1346 = vmatprep.subr.bf16.mxu0 0
        %1347 = vmatpush1.bf16.msra.mxu0 %v1304
        %1348 = vmatprep.subr.bf16.mxu0 0
        %1349 = vmatpush1.bf16.msra.mxu0 %v1305
        %1350 = vmatprep.subr.bf16.mxu0 0
        %1351 = vmatpush1.bf16.msra.mxu0 %v1306
        %1352 = vmatprep.subr.bf16.mxu0 0
        %1353 = vmatpush1.bf16.msra.mxu0 %v1307
        %1354 = vmatprep.subr.bf16.mxu0 0
        %1355 = vmatpush1.bf16.msra.mxu0 %v1308
        %1356 = vmatprep.subr.bf16.mxu0 0
        %1357 = vmatpush1.bf16.msra.mxu0 %v1309
        %1358 = vmatprep.subr.bf16.mxu0 0
        %1359 = vmatpush1.bf16.msra.mxu0 0
        %1360 = vmatprep.subr.bf16.mxu0 0
        %1361 = vmatpush1.bf16.msra.mxu0 0
        %1362 = vmatprep.subr.bf16.mxu0 0
        %1363 = vmatpush1.bf16.msra.mxu0 0
        %1364 = vmatprep.subr.bf16.mxu0 0
        %1365 = vmatpush1.bf16.msra.mxu0 0
        %1366 = vmatprep.subr.bf16.mxu0 0
        %1367 = vmatpush1.bf16.msra.mxu0 0
        %1368 = vmatprep.subr.bf16.mxu0 0
        %1369 = vmatpush1.bf16.msra.mxu0 0
        %1370 = vmatprep.subr.bf16.mxu0 0
        %1371 = vmatpush1.bf16.msra.mxu0 0
        %1372 = vmatprep.subr.bf16.mxu0 0
        %1373 = vmatpush1.bf16.msra.mxu0 0
        %1374 = vmatprep.mubr.bf16.mxu0 0
        %1375 = vmatmul.mubr.bf16.gmra.mrb[0].mxu0 %v1334
        %v1376 = vpop.f32.mrb[0].mxu0
        %v1377 = vadd.f32 0.0, %v1376
        %v1378 = vpop.f32.mrb[0].mxu0
        %v1379 = vpop.f32.mrb[0].mxu0
        %v1380 = vadd.f32 0.0, %v1379
        %v1381 = vpop.f32.mrb[0].mxu0
        %1382 = vmatprep.mubr.bf16.mxu0 0
        %1383 = vmatmul.mubr.bf16.gmra.mrb[0].mxu0 %v1335
        %v1384 = vpop.f32.mrb[0].mxu0
        %v1385 = vadd.f32 0.0, %v1384
        %v1386 = vpop.f32.mrb[0].mxu0
        %v1387 = vpop.f32.mrb[0].mxu0
        %v1388 = vadd.f32 0.0, %v1387
        %v1389 = vpop.f32.mrb[0].mxu0
        %1390 = vmatprep.mubr.bf16.mxu0 0
        %1391 = vmatmul.mubr.bf16.gmra.mrb[0].mxu0 %v1336
        %v1392 = vpop.f32.mrb[0].mxu0
        %v1393 = vadd.f32 0.0, %v1392
        %v1394 = vpop.f32.mrb[0].mxu0
        %v1395 = vpop.f32.mrb[0].mxu0
        %v1396 = vadd.f32 0.0, %v1395
        %v1397 = vpop.f32.mrb[0].mxu0
        %1398 = vmatprep.mubr.bf16.mxu0 0
        %1399 = vmatmul.mubr.bf16.gmra.mrb[0].mxu0 %v1337
        %v1400 = vpop.f32.mrb[0].mxu0
        %v1401 = vadd.f32 0.0, %v1400
        %v1402 = vpop.f32.mrb[0].mxu0
        %v1403 = vpop.f32.mrb[0].mxu0
        %v1404 = vadd.f32 0.0, %v1403
        %v1405 = vpop.f32.mrb[0].mxu0
        %1406 = vmatprep.mubr.bf16.mxu0 0
        %1407 = vmatmul.mubr.bf16.gmra.mrb[0].mxu0 %v1338
        %v1408 = vpop.f32.mrb[0].mxu0
        %v1409 = vadd.f32 0.0, %v1408
        %v1410 = vpop.f32.mrb[0].mxu0
        %v1411 = vpop.f32.mrb[0].mxu0
        %v1412 = vadd.f32 0.0, %v1411
        %v1413 = vpop.f32.mrb[0].mxu0
        %1414 = vmatprep.mubr.bf16.mxu0 0
        %1415 = vmatmul.mubr.bf16.gmra.mrb[0].mxu0 %v1339
        %v1416 = vpop.f32.mrb[0].mxu0
        %v1417 = vadd.f32 0.0, %v1416
        %v1418 = vpop.f32.mrb[0].mxu0
        %v1419 = vpop.f32.mrb[0].mxu0
        %v1420 = vadd.f32 0.0, %v1419
        %v1421 = vpop.f32.mrb[0].mxu0
        %1422 = vmatprep.mubr.bf16.mxu0 0
        %1423 = vmatmul.mubr.bf16.gmra.mrb[0].mxu0 %v1340
        %v1424 = vpop.f32.mrb[0].mxu0
        %v1425 = vadd.f32 0.0, %v1424
        %v1426 = vpop.f32.mrb[0].mxu0
        %v1427 = vpop.f32.mrb[0].mxu0
        %v1428 = vadd.f32 0.0, %v1427
        %v1429 = vpop.f32.mrb[0].mxu0
        %1430 = vmatprep.mubr.bf16.mxu0 0
        %1431 = vmatmul.mubr.bf16.gmra.mrb[0].mxu0 %v1341
        %v1432 = vpop.f32.mrb[0].mxu0
        %v1433 = vadd.f32 0.0, %v1432
        %v1434 = vpop.f32.mrb[0].mxu0
        %v1435 = vpop.f32.mrb[0].mxu0
        %v1436 = vadd.f32 0.0, %v1435
        %v1437 = vpop.f32.mrb[0].mxu0
        %1438 = vdwg.mxu0
        %v1439 = vadd.f32 %v1310, %v1377
        %v1440 = vadd.f32 %v1311, %v1380
        %v1441 = vadd.f32 %v1312, %v1385
        %v1442 = vadd.f32 %v1313, %v1388
        %v1443 = vadd.f32 %v1314, %v1393
        %v1444 = vadd.f32 %v1315, %v1396
        %v1445 = vadd.f32 %v1316, %v1401
        %v1446 = vadd.f32 %v1317, %v1404
        %v1447 = vadd.f32 %v1318, %v1409
        %v1448 = vadd.f32 %v1319, %v1412
        %v1449 = vadd.f32 %v1320, %v1417
        %v1450 = vadd.f32 %v1321, %v1420
        %v1451 = vadd.f32 %v1322, %v1425
        %v1452 = vadd.f32 %v1323, %v1428
        %v1453 = vadd.f32 %v1324, %v1433
        %v1454 = vadd.f32 %v1325, %v1436
        %1455 = vst [vmem:[#allocation4] sm:$0xff] %v1439
        %1456 = vst [vmem:[#allocation4 + $0x8] sm:$0xff] %v1440
        %1457 = vst [vmem:[#allocation4 + $0x10] sm:$0xff] %v1441
        %1458 = vst [vmem:[#allocation4 + $0x18] sm:$0xff] %v1442
        %1459 = vst [vmem:[#allocation4 + $0x20] sm:$0xff] %v1443
        %1460 = vst [vmem:[#allocation4 + $0x28] sm:$0xff] %v1444
        %1461 = vst [vmem:[#allocation4 + $0x30] sm:$0xff] %v1445
        %1462 = vst [vmem:[#allocation4 + $0x38] sm:$0xff] %v1446
        %1463 = vst [vmem:[#allocation4 + $0x40] sm:$0xff] %v1447
        %1464 = vst [vmem:[#allocation4 + $0x48] sm:$0xff] %v1448
        %1465 = vst [vmem:[#allocation4 + $0x50] sm:$0xff] %v1449
        %1466 = vst [vmem:[#allocation4 + $0x58] sm:$0xff] %v1450
        %1467 = vst [vmem:[#allocation4 + $0x60] sm:$0xff] %v1451
        %1468 = vst [vmem:[#allocation4 + $0x68] sm:$0xff] %v1452
        %1469 = vst [vmem:[#allocation4 + $0x70] sm:$0xff] %v1453
        %1470 = vst [vmem:[#allocation4 + $0x78] sm:$0xff] %v1454
        // Predicated region
        $region81: #{tpu_custom_call.1} parent=71 // pred_check
          %p1471 = pneg %p583
        $region82: #{tpu_custom_call.1} parent=71 // pred_check_branch
          %1473 = sbr.rel (%p1471) target = $region84
        $region83: #{tpu_custom_call.1} parent=71 // pred_region
          %v1474 = vld [vmem:[#allocation2] sm:$0xff]
          %v1475 = vld [vmem:[#allocation2 + $0x8] sm:$0xff]
          %v1476 = vld [vmem:[#allocation2 + $0x10] sm:$0xff]
          %v1477 = vld [vmem:[#allocation2 + $0x18] sm:$0xff]
          %v1478 = vld [vmem:[#allocation2 + $0x20] sm:$0xff]
          %v1479 = vld [vmem:[#allocation2 + $0x28] sm:$0xff]
          %v1480 = vld [vmem:[#allocation2 + $0x30] sm:$0xff]
          %v1481 = vld [vmem:[#allocation2 + $0x38] sm:$0xff]
          %v1482 = vld [vmem:[#allocation2 + $0x40] sm:$0xff]
          %v1483 = vld [vmem:[#allocation2 + $0x48] sm:$0xff]
          %v1484 = vld [vmem:[#allocation2 + $0x50] sm:$0xff]
          %v1485 = vld [vmem:[#allocation2 + $0x58] sm:$0xff]
          %v1486 = vld [vmem:[#allocation2 + $0x60] sm:$0xff]
          %v1487 = vld [vmem:[#allocation2 + $0x68] sm:$0xff]
          %v1488 = vld [vmem:[#allocation2 + $0x70] sm:$0xff]
          %v1489 = vld [vmem:[#allocation2 + $0x78] sm:$0xff]
          %v1490 = vld [vmem:[#allocation4] sm:$0xff]
          %v1491 = vld [vmem:[#allocation4 + $0x8] sm:$0xff]
          %v1492 = vld [vmem:[#allocation4 + $0x10] sm:$0xff]
          %v1493 = vld [vmem:[#allocation4 + $0x18] sm:$0xff]
          %v1494 = vld [vmem:[#allocation4 + $0x20] sm:$0xff]
          %v1495 = vld [vmem:[#allocation4 + $0x28] sm:$0xff]
          %v1496 = vld [vmem:[#allocation4 + $0x30] sm:$0xff]
          %v1497 = vld [vmem:[#allocation4 + $0x38] sm:$0xff]
          %v1498 = vld [vmem:[#allocation4 + $0x40] sm:$0xff]
          %v1499 = vld [vmem:[#allocation4 + $0x48] sm:$0xff]
          %v1500 = vld [vmem:[#allocation4 + $0x50] sm:$0xff]
          %v1501 = vld [vmem:[#allocation4 + $0x58] sm:$0xff]
          %v1502 = vld [vmem:[#allocation4 + $0x60] sm:$0xff]
          %v1503 = vld [vmem:[#allocation4 + $0x68] sm:$0xff]
          %v1504 = vld [vmem:[#allocation4 + $0x70] sm:$0xff]
          %v1505 = vld [vmem:[#allocation4 + $0x78] sm:$0xff]
          %v1506 = vadd.f32 %v1474, %v1490
          %v1507 = vadd.f32 %v1475, %v1491
          %v1508 = vadd.f32 %v1476, %v1492
          %v1509 = vadd.f32 %v1477, %v1493
          %v1510 = vadd.f32 %v1478, %v1494
          %v1511 = vadd.f32 %v1479, %v1495
          %v1512 = vadd.f32 %v1480, %v1496
          %v1513 = vadd.f32 %v1481, %v1497
          %v1514 = vadd.f32 %v1482, %v1498
          %v1515 = vadd.f32 %v1483, %v1499
          %v1516 = vadd.f32 %v1484, %v1500
          %v1517 = vadd.f32 %v1485, %v1501
          %v1518 = vadd.f32 %v1486, %v1502
          %v1519 = vadd.f32 %v1487, %v1503
          %v1520 = vadd.f32 %v1488, %v1504
          %v1521 = vadd.f32 %v1489, %v1505
          %v1522 = vpack.c.bf16 %v1507, %v1506
          %v1523 = vpack.c.bf16 %v1509, %v1508
          %v1524 = vpack.c.bf16 %v1511, %v1510
          %v1525 = vpack.c.bf16 %v1513, %v1512
          %v1526 = vpack.c.bf16 %v1515, %v1514
          %v1527 = vpack.c.bf16 %v1517, %v1516
          %v1528 = vpack.c.bf16 %v1519, %v1518
          %v1529 = vpack.c.bf16 %v1521, %v1520
          %v1530 = vld [vmem:[%s569] sm:$0xf]
          %v1531 = vld [vmem:[%s569 + $0x4] sm:$0xf]
          %v1532 = vld [vmem:[%s569 + $0x8] sm:$0xf]
          %v1533 = vld [vmem:[%s569 + $0xc] sm:$0xf]
          %v1534 = vld [vmem:[%s569 + $0x10] sm:$0xf]
          %v1535 = vld [vmem:[%s569 + $0x14] sm:$0xf]
          %v1536 = vld [vmem:[%s569 + $0x18] sm:$0xf]
          %v1537 = vld [vmem:[%s569 + $0x1c] sm:$0xf]
          %v1538 = vld [vmem:[%s569 + $0x20] sm:$0xf]
          %v1539 = vld [vmem:[%s569 + $0x24] sm:$0xf]
          %v1540 = vld [vmem:[%s569 + $0x28] sm:$0xf]
          %v1541 = vld [vmem:[%s569 + $0x2c] sm:$0xf]
          %v1542 = vld [vmem:[%s569 + $0x30] sm:$0xf]
          %v1543 = vld [vmem:[%s569 + $0x34] sm:$0xf]
          %v1544 = vld [vmem:[%s569 + $0x38] sm:$0xf]
          %v1545 = vld [vmem:[%s569 + $0x3c] sm:$0xf]
          %v1546 = vld [vmem:[%s572] sm:$0x1]
          %v1548 = vlaneseq
          %v1549 = vshrl.u32 %v1548, 7
          %v1550 = vsub.s32 0, %v1549
          %v1551 = vrot.slane %v1546, %v1550
          %v1569 = vunpack.c.l.b16 %v1530
          %v1570 = vunpack.c.l.b16 %v1531
          %v1571 = vunpack.c.l.b16 %v1532
          %v1572 = vunpack.c.l.b16 %v1533
          %v1573 = vunpack.c.l.b16 %v1534
          %v1574 = vunpack.c.l.b16 %v1535
          %v1575 = vunpack.c.l.b16 %v1536
          %v1576 = vunpack.c.l.b16 %v1537
          %v1577 = vunpack.c.l.b16 %v1538
          %v1578 = vunpack.c.l.b16 %v1539
          %v1579 = vunpack.c.l.b16 %v1540
          %v1580 = vunpack.c.l.b16 %v1541
          %v1581 = vunpack.c.l.b16 %v1542
          %v1582 = vunpack.c.l.b16 %v1543
          %v1583 = vunpack.c.l.b16 %v1544
          %v1584 = vunpack.c.l.b16 %v1545
          %v1585 = vpack.c.b16 %v1570, %v1569
          %v1586 = vpack.c.b16 %v1572, %v1571
          %v1587 = vpack.c.b16 %v1574, %v1573
          %v1588 = vpack.c.b16 %v1576, %v1575
          %v1589 = vpack.c.b16 %v1578, %v1577
          %v1590 = vpack.c.b16 %v1580, %v1579
          %v1591 = vpack.c.b16 %v1582, %v1581
          %v1592 = vpack.c.b16 %v1584, %v1583
          %1601 = vmatprep.subr.bf16.mxu0 0
          %1602 = vmatpush1.bf16.msra.mxu0 %v1585
          %1603 = vmatprep.subr.bf16.mxu0 0
          %1604 = vmatpush1.bf16.msra.mxu0 %v1586
          %1605 = vmatprep.subr.bf16.mxu0 0
          %1606 = vmatpush1.bf16.msra.mxu0 %v1587
          %1607 = vmatprep.subr.bf16.mxu0 0
          %1608 = vmatpush1.bf16.msra.mxu0 %v1588
          %1609 = vmatprep.subr.bf16.mxu0 0
          %1610 = vmatpush1.bf16.msra.mxu0 %v1589
          %1611 = vmatprep.subr.bf16.mxu0 0
          %1612 = vmatpush1.bf16.msra.mxu0 %v1590
          %1613 = vmatprep.subr.bf16.mxu0 0
          %1614 = vmatpush1.bf16.msra.mxu0 %v1591
          %1615 = vmatprep.subr.bf16.mxu0 0
          %1616 = vmatpush1.bf16.msra.mxu0 %v1592
          %1617 = vmatprep.subr.bf16.mxu0 0
          %1618 = vmatpush1.bf16.msra.mxu0 0
          %1619 = vmatprep.subr.bf16.mxu0 0
          %1620 = vmatpush1.bf16.msra.mxu0 0
          %1621 = vmatprep.subr.bf16.mxu0 0
          %1622 = vmatpush1.bf16.msra.mxu0 0
          %1623 = vmatprep.subr.bf16.mxu0 0
          %1624 = vmatpush1.bf16.msra.mxu0 0
          %1625 = vmatprep.subr.bf16.mxu0 0
          %1626 = vmatpush1.bf16.msra.mxu0 0
          %1627 = vmatprep.subr.bf16.mxu0 0
          %1628 = vmatpush1.bf16.msra.mxu0 0
          %1629 = vmatprep.subr.bf16.mxu0 0
          %1630 = vmatpush1.bf16.msra.mxu0 0
          %1631 = vmatprep.subr.bf16.mxu0 0
          %1632 = vmatpush1.bf16.msra.mxu0 0
          %1633 = vmatprep.mubr.bf16.mxu0 0
          %1634 = vmatmul.mubr.bf16.gmra.mrb[0].mxu0 %v1522
          %v1635 = vpop.f32.mrb[0].mxu0
          %v1636 = vadd.f32 %v1551, %v1635
          %v1637 = vpop.f32.mrb[0].mxu0
          %v1638 = vpop.f32.mrb[0].mxu0
          %v1639 = vadd.f32 %v1551, %v1638
          %v1640 = vpop.f32.mrb[0].mxu0
          %1641 = vmatprep.mubr.bf16.mxu0 0
          %1642 = vmatmul.mubr.bf16.gmra.mrb[0].mxu0 %v1523
          %v1643 = vpop.f32.mrb[0].mxu0
          %v1644 = vadd.f32 %v1551, %v1643
          %v1645 = vpop.f32.mrb[0].mxu0
          %v1646 = vpop.f32.mrb[0].mxu0
          %v1647 = vadd.f32 %v1551, %v1646
          %v1648 = vpop.f32.mrb[0].mxu0
          %1649 = vmatprep.mubr.bf16.mxu0 0
          %1650 = vmatmul.mubr.bf16.gmra.mrb[0].mxu0 %v1524
          %v1651 = vpop.f32.mrb[0].mxu0
          %v1652 = vadd.f32 %v1551, %v1651
          %v1653 = vpop.f32.mrb[0].mxu0
          %v1654 = vpop.f32.mrb[0].mxu0
          %v1655 = vadd.f32 %v1551, %v1654
          %v1656 = vpop.f32.mrb[0].mxu0
          %1657 = vmatprep.mubr.bf16.mxu0 0
          %1658 = vmatmul.mubr.bf16.gmra.mrb[0].mxu0 %v1525
          %v1659 = vpop.f32.mrb[0].mxu0
          %v1660 = vadd.f32 %v1551, %v1659
          %v1661 = vpop.f32.mrb[0].mxu0
          %v1662 = vpop.f32.mrb[0].mxu0
          %v1663 = vadd.f32 %v1551, %v1662
          %v1664 = vpop.f32.mrb[0].mxu0
          %1665 = vmatprep.mubr.bf16.mxu0 0
          %1666 = vmatmul.mubr.bf16.gmra.mrb[0].mxu0 %v1526
          %v1667 = vpop.f32.mrb[0].mxu0
          %v1668 = vadd.f32 %v1551, %v1667
          %v1669 = vpop.f32.mrb[0].mxu0
          %v1670 = vpop.f32.mrb[0].mxu0
          %v1671 = vadd.f32 %v1551, %v1670
          %v1672 = vpop.f32.mrb[0].mxu0
          %1673 = vmatprep.mubr.bf16.mxu0 0
          %1674 = vmatmul.mubr.bf16.gmra.mrb[0].mxu0 %v1527
          %v1675 = vpop.f32.mrb[0].mxu0
          %v1676 = vadd.f32 %v1551, %v1675
          %v1677 = vpop.f32.mrb[0].mxu0
          %v1678 = vpop.f32.mrb[0].mxu0
          %v1679 = vadd.f32 %v1551, %v1678
          %v1680 = vpop.f32.mrb[0].mxu0
          %1681 = vmatprep.mubr.bf16.mxu0 0
          %1682 = vmatmul.mubr.bf16.gmra.mrb[0].mxu0 %v1528
          %v1683 = vpop.f32.mrb[0].mxu0
          %v1684 = vadd.f32 %v1551, %v1683
          %v1685 = vpop.f32.mrb[0].mxu0
          %v1686 = vpop.f32.mrb[0].mxu0
          %v1687 = vadd.f32 %v1551, %v1686
          %v1688 = vpop.f32.mrb[0].mxu0
          %1689 = vmatprep.mubr.bf16.mxu0 0
          %1690 = vmatmul.mubr.bf16.gmra.mrb[0].mxu0 %v1529
          %v1691 = vpop.f32.mrb[0].mxu0
          %v1692 = vadd.f32 %v1551, %v1691
          %v1693 = vpop.f32.mrb[0].mxu0
          %v1694 = vpop.f32.mrb[0].mxu0
          %v1695 = vadd.f32 %v1551, %v1694
          %v1696 = vpop.f32.mrb[0].mxu0
          %1697 = vdwg.mxu0
          %v1698 = vmax.f32 %v1636, 0.0
          %v1699 = vmax.f32 %v1639, 0.0
          %v1700 = vmax.f32 %v1644, 0.0
          %v1701 = vmax.f32 %v1647, 0.0
          %v1702 = vmax.f32 %v1652, 0.0
          %v1703 = vmax.f32 %v1655, 0.0
          %v1704 = vmax.f32 %v1660, 0.0
          %v1705 = vmax.f32 %v1663, 0.0
          %v1706 = vmax.f32 %v1668, 0.0
          %v1707 = vmax.f32 %v1671, 0.0
          %v1708 = vmax.f32 %v1676, 0.0
          %v1709 = vmax.f32 %v1679, 0.0
          %v1710 = vmax.f32 %v1684, 0.0
          %v1711 = vmax.f32 %v1687, 0.0
          %v1712 = vmax.f32 %v1692, 0.0
          %v1713 = vmax.f32 %v1695, 0.0
          %v1714 = vpack.c.bf16 %v1699, %v1698
          %v1715 = vpack.c.bf16 %v1701, %v1700
          %v1716 = vpack.c.bf16 %v1703, %v1702
          %v1717 = vpack.c.bf16 %v1705, %v1704
          %v1718 = vpack.c.bf16 %v1707, %v1706
          %v1719 = vpack.c.bf16 %v1709, %v1708
          %v1720 = vpack.c.bf16 %v1711, %v1710
          %v1721 = vpack.c.bf16 %v1713, %v1712
          %v1722 = vld [vmem:[%s577] sm:$0xf]
          %v1723 = vld [vmem:[%s577 + $0x4] sm:$0xf]
          %v1724 = vld [vmem:[%s577 + $0x8] sm:$0xf]
          %v1725 = vld [vmem:[%s577 + $0xc] sm:$0xf]
          %v1726 = vld [vmem:[%s577 + $0x10] sm:$0xf]
          %v1727 = vld [vmem:[%s577 + $0x14] sm:$0xf]
          %v1728 = vld [vmem:[%s577 + $0x18] sm:$0xf]
          %v1729 = vld [vmem:[%s577 + $0x1c] sm:$0xf]
          %v1730 = vld [vmem:[%s577 + $0x20] sm:$0xf]
          %v1731 = vld [vmem:[%s577 + $0x24] sm:$0xf]
          %v1732 = vld [vmem:[%s577 + $0x28] sm:$0xf]
          %v1733 = vld [vmem:[%s577 + $0x2c] sm:$0xf]
          %v1734 = vld [vmem:[%s577 + $0x30] sm:$0xf]
          %v1735 = vld [vmem:[%s577 + $0x34] sm:$0xf]
          %v1736 = vld [vmem:[%s577 + $0x38] sm:$0xf]
          %v1737 = vld [vmem:[%s577 + $0x3c] sm:$0xf]
          %v1738 = vld [vmem:[%s580] sm:$0x1]
          %v1740 = vlaneseq
          %v1741 = vshrl.u32 %v1740, 7
          %v1742 = vsub.s32 0, %v1741
          %v1743 = vrot.slane %v1738, %v1742
          %v1761 = vunpack.c.l.b16 %v1722
          %v1762 = vunpack.c.l.b16 %v1723
          %v1763 = vunpack.c.l.b16 %v1724
          %v1764 = vunpack.c.l.b16 %v1725
          %v1765 = vunpack.c.l.b16 %v1726
          %v1766 = vunpack.c.l.b16 %v1727
          %v1767 = vunpack.c.l.b16 %v1728
          %v1768 = vunpack.c.l.b16 %v1729
          %v1769 = vunpack.c.l.b16 %v1730
          %v1770 = vunpack.c.l.b16 %v1731
          %v1771 = vunpack.c.l.b16 %v1732
          %v1772 = vunpack.c.l.b16 %v1733
          %v1773 = vunpack.c.l.b16 %v1734
          %v1774 = vunpack.c.l.b16 %v1735
          %v1775 = vunpack.c.l.b16 %v1736
          %v1776 = vunpack.c.l.b16 %v1737
          %v1777 = vpack.c.b16 %v1762, %v1761
          %v1778 = vpack.c.b16 %v1764, %v1763
          %v1779 = vpack.c.b16 %v1766, %v1765
          %v1780 = vpack.c.b16 %v1768, %v1767
          %v1781 = vpack.c.b16 %v1770, %v1769
          %v1782 = vpack.c.b16 %v1772, %v1771
          %v1783 = vpack.c.b16 %v1774, %v1773
          %v1784 = vpack.c.b16 %v1776, %v1775
          %1793 = vmatprep.subr.bf16.mxu0 0
          %1794 = vmatpush1.bf16.msra.mxu0 %v1777
          %1795 = vmatprep.subr.bf16.mxu0 0
          %1796 = vmatpush1.bf16.msra.mxu0 %v1778
          %1797 = vmatprep.subr.bf16.mxu0 0
          %1798 = vmatpush1.bf16.msra.mxu0 %v1779
          %1799 = vmatprep.subr.bf16.mxu0 0
          %1800 = vmatpush1.bf16.msra.mxu0 %v1780
          %1801 = vmatprep.subr.bf16.mxu0 0
          %1802 = vmatpush1.bf16.msra.mxu0 %v1781
          %1803 = vmatprep.subr.bf16.mxu0 0
          %1804 = vmatpush1.bf16.msra.mxu0 %v1782
          %1805 = vmatprep.subr.bf16.mxu0 0
          %1806 = vmatpush1.bf16.msra.mxu0 %v1783
          %1807 = vmatprep.subr.bf16.mxu0 0
          %1808 = vmatpush1.bf16.msra.mxu0 %v1784
          %1809 = vmatprep.subr.bf16.mxu0 0
          %1810 = vmatpush1.bf16.msra.mxu0 0
          %1811 = vmatprep.subr.bf16.mxu0 0
          %1812 = vmatpush1.bf16.msra.mxu0 0
          %1813 = vmatprep.subr.bf16.mxu0 0
          %1814 = vmatpush1.bf16.msra.mxu0 0
          %1815 = vmatprep.subr.bf16.mxu0 0
          %1816 = vmatpush1.bf16.msra.mxu0 0
          %1817 = vmatprep.subr.bf16.mxu0 0
          %1818 = vmatpush1.bf16.msra.mxu0 0
          %1819 = vmatprep.subr.bf16.mxu0 0
          %1820 = vmatpush1.bf16.msra.mxu0 0
          %1821 = vmatprep.subr.bf16.mxu0 0
          %1822 = vmatpush1.bf16.msra.mxu0 0
          %1823 = vmatprep.subr.bf16.mxu0 0
          %1824 = vmatpush1.bf16.msra.mxu0 0
          %1825 = vmatprep.mubr.bf16.mxu0 0
          %1826 = vmatmul.mubr.bf16.gmra.mrb[0].mxu0 %v1714
          %v1827 = vpop.f32.mrb[0].mxu0
          %v1828 = vadd.f32 %v1743, %v1827
          %v1829 = vpop.f32.mrb[0].mxu0
          %v1830 = vpop.f32.mrb[0].mxu0
          %v1831 = vadd.f32 %v1743, %v1830
          %v1832 = vpop.f32.mrb[0].mxu0
          %1833 = vmatprep.mubr.bf16.mxu0 0
          %1834 = vmatmul.mubr.bf16.gmra.mrb[0].mxu0 %v1715
          %v1835 = vpop.f32.mrb[0].mxu0
          %v1836 = vadd.f32 %v1743, %v1835
          %v1837 = vpop.f32.mrb[0].mxu0
          %v1838 = vpop.f32.mrb[0].mxu0
          %v1839 = vadd.f32 %v1743, %v1838
          %v1840 = vpop.f32.mrb[0].mxu0
          %1841 = vmatprep.mubr.bf16.mxu0 0
          %1842 = vmatmul.mubr.bf16.gmra.mrb[0].mxu0 %v1716
          %v1843 = vpop.f32.mrb[0].mxu0
          %v1844 = vadd.f32 %v1743, %v1843
          %v1845 = vpop.f32.mrb[0].mxu0
          %v1846 = vpop.f32.mrb[0].mxu0
          %v1847 = vadd.f32 %v1743, %v1846
          %v1848 = vpop.f32.mrb[0].mxu0
          %1849 = vmatprep.mubr.bf16.mxu0 0
          %1850 = vmatmul.mubr.bf16.gmra.mrb[0].mxu0 %v1717
          %v1851 = vpop.f32.mrb[0].mxu0
          %v1852 = vadd.f32 %v1743, %v1851
          %v1853 = vpop.f32.mrb[0].mxu0
          %v1854 = vpop.f32.mrb[0].mxu0
          %v1855 = vadd.f32 %v1743, %v1854
          %v1856 = vpop.f32.mrb[0].mxu0
          %1857 = vmatprep.mubr.bf16.mxu0 0
          %1858 = vmatmul.mubr.bf16.gmra.mrb[0].mxu0 %v1718
          %v1859 = vpop.f32.mrb[0].mxu0
          %v1860 = vadd.f32 %v1743, %v1859
          %v1861 = vpop.f32.mrb[0].mxu0
          %v1862 = vpop.f32.mrb[0].mxu0
          %v1863 = vadd.f32 %v1743, %v1862
          %v1864 = vpop.f32.mrb[0].mxu0
          %1865 = vmatprep.mubr.bf16.mxu0 0
          %1866 = vmatmul.mubr.bf16.gmra.mrb[0].mxu0 %v1719
          %v1867 = vpop.f32.mrb[0].mxu0
          %v1868 = vadd.f32 %v1743, %v1867
          %v1869 = vpop.f32.mrb[0].mxu0
          %v1870 = vpop.f32.mrb[0].mxu0
          %v1871 = vadd.f32 %v1743, %v1870
          %v1872 = vpop.f32.mrb[0].mxu0
          %1873 = vmatprep.mubr.bf16.mxu0 0
          %1874 = vmatmul.mubr.bf16.gmra.mrb[0].mxu0 %v1720
          %v1875 = vpop.f32.mrb[0].mxu0
          %v1876 = vadd.f32 %v1743, %v1875
          %v1877 = vpop.f32.mrb[0].mxu0
          %v1878 = vpop.f32.mrb[0].mxu0
          %v1879 = vadd.f32 %v1743, %v1878
          %v1880 = vpop.f32.mrb[0].mxu0
          %1881 = vmatprep.mubr.bf16.mxu0 0
          %1882 = vmatmul.mubr.bf16.gmra.mrb[0].mxu0 %v1721
          %v1883 = vpop.f32.mrb[0].mxu0
          %v1884 = vadd.f32 %v1743, %v1883
          %v1885 = vpop.f32.mrb[0].mxu0
          %v1886 = vpop.f32.mrb[0].mxu0
          %v1887 = vadd.f32 %v1743, %v1886
          %v1888 = vpop.f32.mrb[0].mxu0
          %1889 = vdwg.mxu0
          %v1890 = vmax.f32 %v1828, 0.0
          %v1891 = vmax.f32 %v1831, 0.0
          %v1892 = vmax.f32 %v1836, 0.0
          %v1893 = vmax.f32 %v1839, 0.0
          %v1894 = vmax.f32 %v1844, 0.0
          %v1895 = vmax.f32 %v1847, 0.0
          %v1896 = vmax.f32 %v1852, 0.0
          %v1897 = vmax.f32 %v1855, 0.0
          %v1898 = vmax.f32 %v1860, 0.0
          %v1899 = vmax.f32 %v1863, 0.0
          %v1900 = vmax.f32 %v1868, 0.0
          %v1901 = vmax.f32 %v1871, 0.0
          %v1902 = vmax.f32 %v1876, 0.0
          %v1903 = vmax.f32 %v1879, 0.0
          %v1904 = vmax.f32 %v1884, 0.0
          %v1905 = vmax.f32 %v1887, 0.0
          %1906 = vst [vmem:[#allocation2] sm:$0xff] %v1890
          %1907 = vst [vmem:[#allocation2 + $0x8] sm:$0xff] %v1891
          %1908 = vst [vmem:[#allocation2 + $0x10] sm:$0xff] %v1892
          %1909 = vst [vmem:[#allocation2 + $0x18] sm:$0xff] %v1893
          %1910 = vst [vmem:[#allocation2 + $0x20] sm:$0xff] %v1894
          %1911 = vst [vmem:[#allocation2 + $0x28] sm:$0xff] %v1895
          %1912 = vst [vmem:[#allocation2 + $0x30] sm:$0xff] %v1896
          %1913 = vst [vmem:[#allocation2 + $0x38] sm:$0xff] %v1897
          %1914 = vst [vmem:[#allocation2 + $0x40] sm:$0xff] %v1898
          %1915 = vst [vmem:[#allocation2 + $0x48] sm:$0xff] %v1899
          %1916 = vst [vmem:[#allocation2 + $0x50] sm:$0xff] %v1900
          %1917 = vst [vmem:[#allocation2 + $0x58] sm:$0xff] %v1901
          %1918 = vst [vmem:[#allocation2 + $0x60] sm:$0xff] %v1902
          %1919 = vst [vmem:[#allocation2 + $0x68] sm:$0xff] %v1903
          %1920 = vst [vmem:[#allocation2 + $0x70] sm:$0xff] %v1904
          %1921 = vst [vmem:[#allocation2 + $0x78] sm:$0xff] %v1905
          %v1922 = vpack.c.bf16 %v1891, %v1890
          %v1923 = vpack.c.bf16 %v1893, %v1892
          %v1924 = vpack.c.bf16 %v1895, %v1894
          %v1925 = vpack.c.bf16 %v1897, %v1896
          %v1926 = vpack.c.bf16 %v1899, %v1898
          %v1927 = vpack.c.bf16 %v1901, %v1900
          %v1928 = vpack.c.bf16 %v1903, %v1902
          %v1929 = vpack.c.bf16 %v1905, %v1904
          %1930 = vst [vmem:[#allocation3] sm:$0xff] %v1922
          %1931 = vst [vmem:[#allocation3 + $0x8] sm:$0xff] %v1923
          %1932 = vst [vmem:[#allocation3 + $0x10] sm:$0xff] %v1924
          %1933 = vst [vmem:[#allocation3 + $0x18] sm:$0xff] %v1925
          %1934 = vst [vmem:[#allocation3 + $0x20] sm:$0xff] %v1926
          %1935 = vst [vmem:[#allocation3 + $0x28] sm:$0xff] %v1927
          %1936 = vst [vmem:[#allocation3 + $0x30] sm:$0xff] %v1928
          %1937 = vst [vmem:[#allocation3 + $0x38] sm:$0xff] %v1929
        $region84: #{tpu_custom_call.1} parent=71 // pred_fallthru
          _
        %p1938 = scmp.eq.s32.totalorder %s29, 2
        %p1939 = pnand %p1938, %p583
        %p1940 = pneg %p1939
        // Predicated region
        $region85: #{tpu_custom_call.1} parent=71 // pred_check
          _
        $region86: #{tpu_custom_call.1} parent=71 // pred_check_branch
          %1942 = sbr.rel (%p1939) target = $region88
        $region87: #{tpu_custom_call.1} parent=71 // pred_region
          %v1943 = vld [vmem:[%s4] sm:$0xff]
          %v1944 = vld [vmem:[%s4 + $0x8] sm:$0xff]
          %v1945 = vld [vmem:[%s4 + $0x10] sm:$0xff]
          %v1946 = vld [vmem:[%s4 + $0x18] sm:$0xff]
          %v1947 = vld [vmem:[%s4 + $0x20] sm:$0xff]
          %v1948 = vld [vmem:[%s4 + $0x28] sm:$0xff]
          %v1949 = vld [vmem:[%s4 + $0x30] sm:$0xff]
          %v1950 = vld [vmem:[%s4 + $0x38] sm:$0xff]
          %v1951 = vld [vmem:[%s4 + $0x40] sm:$0xff]
          %v1952 = vld [vmem:[%s4 + $0x48] sm:$0xff]
          %v1953 = vld [vmem:[%s4 + $0x50] sm:$0xff]
          %v1954 = vld [vmem:[%s4 + $0x58] sm:$0xff]
          %v1955 = vld [vmem:[%s4 + $0x60] sm:$0xff]
          %v1956 = vld [vmem:[%s4 + $0x68] sm:$0xff]
          %v1957 = vld [vmem:[%s4 + $0x70] sm:$0xff]
          %v1958 = vld [vmem:[%s4 + $0x78] sm:$0xff]
          %1959 = vset.pattern.permute.xlu0 0
          %1960 = vperm.xlu0 %1959, %v1943
          %v1961 = vpop.permute.xlu0 %1960
          %1962 = vset.pattern.permute.xlu0 0
          %1963 = vperm.xlu0 %1962, %v1944
          %v1964 = vpop.permute.xlu0 %1963
          %1965 = vset.pattern.permute.xlu0 0
          %1966 = vperm.xlu0 %1965, %v1945
          %v1967 = vpop.permute.xlu0 %1966
          %1968 = vset.pattern.permute.xlu0 0
          %1969 = vperm.xlu0 %1968, %v1946
          %v1970 = vpop.permute.xlu0 %1969
          %1971 = vset.pattern.permute.xlu0 0
          %1972 = vperm.xlu0 %1971, %v1947
          %v1973 = vpop.permute.xlu0 %1972
          %1974 = vset.pattern.permute.xlu0 0
          %1975 = vperm.xlu0 %1974, %v1948
          %v1976 = vpop.permute.xlu0 %1975
          %1977 = vset.pattern.permute.xlu0 0
          %1978 = vperm.xlu0 %1977, %v1949
          %v1979 = vpop.permute.xlu0 %1978
          %1980 = vset.pattern.permute.xlu0 0
          %1981 = vperm.xlu0 %1980, %v1950
          %v1982 = vpop.permute.xlu0 %1981
          %1983 = vset.pattern.permute.xlu0 0
          %1984 = vperm.xlu0 %1983, %v1951
          %v1985 = vpop.permute.xlu0 %1984
          %1986 = vset.pattern.permute.xlu0 0
          %1987 = vperm.xlu0 %1986, %v1952
          %v1988 = vpop.permute.xlu0 %1987
          %1989 = vset.pattern.permute.xlu0 0
          %1990 = vperm.xlu0 %1989, %v1953
          %v1991 = vpop.permute.xlu0 %1990
          %1992 = vset.pattern.permute.xlu0 0
          %1993 = vperm.xlu0 %1992, %v1954
          %v1994 = vpop.permute.xlu0 %1993
          %1995 = vset.pattern.permute.xlu0 0
          %1996 = vperm.xlu0 %1995, %v1955
          %v1997 = vpop.permute.xlu0 %1996
          %1998 = vset.pattern.permute.xlu0 0
          %1999 = vperm.xlu0 %1998, %v1956
          %v2000 = vpop.permute.xlu0 %1999
          %2001 = vset.pattern.permute.xlu0 0
          %2002 = vperm.xlu0 %2001, %v1957
          %v2003 = vpop.permute.xlu0 %2002
          %2004 = vset.pattern.permute.xlu0 0
          %2005 = vperm.xlu0 %2004, %v1958
          %v2006 = vpop.permute.xlu0 %2005
          %vm2007 = vcmp.eq.s32.totalorder %v1961, %v940
          %vm2008 = vcmp.eq.s32.totalorder %v1964, %v940
          %vm2009 = vcmp.eq.s32.totalorder %v1967, %v940
          %vm2010 = vcmp.eq.s32.totalorder %v1970, %v940
          %vm2011 = vcmp.eq.s32.totalorder %v1973, %v940
          %vm2012 = vcmp.eq.s32.totalorder %v1976, %v940
          %vm2013 = vcmp.eq.s32.totalorder %v1979, %v940
          %vm2014 = vcmp.eq.s32.totalorder %v1982, %v940
          %vm2015 = vcmp.eq.s32.totalorder %v1985, %v940
          %vm2016 = vcmp.eq.s32.totalorder %v1988, %v940
          %vm2017 = vcmp.eq.s32.totalorder %v1991, %v940
          %vm2018 = vcmp.eq.s32.totalorder %v1994, %v940
          %vm2019 = vcmp.eq.s32.totalorder %v1997, %v940
          %vm2020 = vcmp.eq.s32.totalorder %v2000, %v940
          %vm2021 = vcmp.eq.s32.totalorder %v2003, %v940
          %vm2022 = vcmp.eq.s32.totalorder %v2006, %v940
          %v2023 = vsel %vm2007, 1, 0
          %v2024 = vsel %vm2008, 1, 0
          %v2025 = vsel %vm2009, 1, 0
          %v2026 = vsel %vm2010, 1, 0
          %v2027 = vsel %vm2011, 1, 0
          %v2028 = vsel %vm2012, 1, 0
          %v2029 = vsel %vm2013, 1, 0
          %v2030 = vsel %vm2014, 1, 0
          %v2031 = vsel %vm2015, 1, 0
          %v2032 = vsel %vm2016, 1, 0
          %v2033 = vsel %vm2017, 1, 0
          %v2034 = vsel %vm2018, 1, 0
          %v2035 = vsel %vm2019, 1, 0
          %v2036 = vsel %vm2020, 1, 0
          %v2037 = vsel %vm2021, 1, 0
          %v2038 = vsel %vm2022, 1, 0
          %v2039 = vcvt.s32.f32 %v2023
          %v2040 = vcvt.s32.f32 %v2024
          %v2041 = vcvt.s32.f32 %v2025
          %v2042 = vcvt.s32.f32 %v2026
          %v2043 = vcvt.s32.f32 %v2027
          %v2044 = vcvt.s32.f32 %v2028
          %v2045 = vcvt.s32.f32 %v2029
          %v2046 = vcvt.s32.f32 %v2030
          %v2047 = vcvt.s32.f32 %v2031
          %v2048 = vcvt.s32.f32 %v2032
          %v2049 = vcvt.s32.f32 %v2033
          %v2050 = vcvt.s32.f32 %v2034
          %v2051 = vcvt.s32.f32 %v2035
          %v2052 = vcvt.s32.f32 %v2036
          %v2053 = vcvt.s32.f32 %v2037
          %v2054 = vcvt.s32.f32 %v2038
          %v2055 = vpack.c.bf16 %v2040, %v2039
          %v2056 = vpack.c.bf16 %v2042, %v2041
          %v2057 = vpack.c.bf16 %v2044, %v2043
          %v2058 = vpack.c.bf16 %v2046, %v2045
          %v2059 = vpack.c.bf16 %v2048, %v2047
          %v2060 = vpack.c.bf16 %v2050, %v2049
          %v2061 = vpack.c.bf16 %v2052, %v2051
          %v2062 = vpack.c.bf16 %v2054, %v2053
          %v2063 = vld [vmem:[#allocation3] sm:$0xff]
          %v2064 = vld [vmem:[#allocation3 + $0x8] sm:$0xff]
          %v2065 = vld [vmem:[#allocation3 + $0x10] sm:$0xff]
          %v2066 = vld [vmem:[#allocation3 + $0x18] sm:$0xff]
          %v2067 = vld [vmem:[#allocation3 + $0x20] sm:$0xff]
          %v2068 = vld [vmem:[#allocation3 + $0x28] sm:$0xff]
          %v2069 = vld [vmem:[#allocation3 + $0x30] sm:$0xff]
          %v2070 = vld [vmem:[#allocation3 + $0x38] sm:$0xff]
          %2071 = vxpose.xlu0.c.b16.start [1/8] %v2055, 128
          %2072 = vxpose.xlu0.c.b16.cont [2/8] %v2056, 128
          %2073 = vxpose.xlu0.c.b16.cont [3/8] %v2057, 128
          %2074 = vxpose.xlu0.c.b16.cont [4/8] %v2058, 128
          %2075 = vxpose.xlu0.c.b16.cont [5/8] %v2059, 128
          %2076 = vxpose.xlu0.c.b16.cont [6/8] %v2060, 128
          %2077 = vxpose.xlu0.c.b16.cont [7/8] %v2061, 128
          %2078 = vxpose.xlu0.c.b16.end [8/8] %v2062, 128
          %v2079 = vpop.trf.xlu0
          %v2080 = vpop.trf.xlu0
          %v2081 = vpop.trf.xlu0
          %v2082 = vpop.trf.xlu0
          %v2083 = vpop.trf.xlu0
          %v2084 = vpop.trf.xlu0
          %v2085 = vpop.trf.xlu0
          %v2086 = vpop.trf.xlu0
          %2087 = vmatprep.subr.bf16.mxu0 0
          %2088 = vmatpush1.bf16.msra.mxu0 %v2063
          %2089 = vmatprep.subr.bf16.mxu0 0
          %2090 = vmatpush1.bf16.msra.mxu0 %v2064
          %2091 = vmatprep.subr.bf16.mxu0 0
          %2092 = vmatpush1.bf16.msra.mxu0 %v2065
          %2093 = vmatprep.subr.bf16.mxu0 0
          %2094 = vmatpush1.bf16.msra.mxu0 %v2066
          %2095 = vmatprep.subr.bf16.mxu0 0
          %2096 = vmatpush1.bf16.msra.mxu0 %v2067
          %2097 = vmatprep.subr.bf16.mxu0 0
          %2098 = vmatpush1.bf16.msra.mxu0 %v2068
          %2099 = vmatprep.subr.bf16.mxu0 0
          %2100 = vmatpush1.bf16.msra.mxu0 %v2069
          %2101 = vmatprep.subr.bf16.mxu0 0
          %2102 = vmatpush1.bf16.msra.mxu0 %v2070
          %2103 = vmatprep.subr.bf16.mxu0 0
          %2104 = vmatpush1.bf16.msra.mxu0 0
          %2105 = vmatprep.subr.bf16.mxu0 0
          %2106 = vmatpush1.bf16.msra.mxu0 0
          %2107 = vmatprep.subr.bf16.mxu0 0
          %2108 = vmatpush1.bf16.msra.mxu0 0
          %2109 = vmatprep.subr.bf16.mxu0 0
          %2110 = vmatpush1.bf16.msra.mxu0 0
          %2111 = vmatprep.subr.bf16.mxu0 0
          %2112 = vmatpush1.bf16.msra.mxu0 0
          %2113 = vmatprep.subr.bf16.mxu0 0
          %2114 = vmatpush1.bf16.msra.mxu0 0
          %2115 = vmatprep.subr.bf16.mxu0 0
          %2116 = vmatpush1.bf16.msra.mxu0 0
          %2117 = vmatprep.subr.bf16.mxu0 0
          %2118 = vmatpush1.bf16.msra.mxu0 0
          %2119 = vmatprep.mubr.bf16.mxu0 0
          %2120 = vmatmul.mubr.bf16.gmra.mrb[0].mxu0 %v2079
          %v2121 = vpop.f32.mrb[0].mxu0
          %v2122 = vadd.f32 0.0, %v2121
          %v2123 = vpop.f32.mrb[0].mxu0
          %v2124 = vpop.f32.mrb[0].mxu0
          %v2125 = vpop.f32.mrb[0].mxu0
          %2126 = vdwg.mxu0
          %2127 = vst [vmem:[#allocation5] sm:$0xff] %v2122
        $region88: #{tpu_custom_call.1} parent=71 // pred_fallthru
          _
        // Predicated region
        $region89: #{tpu_custom_call.1} parent=71 // pred_check
          %p2128 = pneg %p368
        $region90: #{tpu_custom_call.1} parent=71 // pred_check_branch
          %2130 = sbr.rel (%p2128) target = $region92
        $region91: #{tpu_custom_call.1} parent=71 // pred_region
          %s2132 = ssub.s32 128, 128
          %2133 = vsyncadd [#allocation6], %s2132
          %s2135 = sshll.u32 [#allocation5], 4
          %s2136 = int_to_ptr.vmem [resolvable:$true] %s2135
          %2138 = dma.vmem_to_hbm [thread:$0]  %s2136, 128, %s13, [#allocation6]
        $region92: #{tpu_custom_call.1} parent=71 // pred_fallthru
          _
        // Predicated region
        $region93: #{tpu_custom_call.1} parent=71 // pred_check
          %p2139 = pneg %p368
        $region94: #{tpu_custom_call.1} parent=71 // pred_check_branch
          %2141 = sbr.rel (%p2139) target = $region96
        $region95: #{tpu_custom_call.1} parent=71 // pred_region
          %2142 = dma.done [#allocation6], 128
        $region96: #{tpu_custom_call.1} parent=71 // pred_fallthru
          _
      $region72: #{tpu_custom_call.1} parent=5 // pred_fallthru
        _
      %p2143 = scmp.le.s32.totalorder 2, %s20
      // Predicated region
      $region97: #{tpu_custom_call.1} parent=5 // pred_check
        %p2144 = pneg %p2143
      $region98: #{tpu_custom_call.1} parent=5 // pred_check_branch
        %2146 = sbr.rel (%p2144) target = $region100
      $region99: #{tpu_custom_call.1} parent=5 // pred_region
        %s2147 = ssub.s32 %s20, 2
      $region100: #{tpu_custom_call.1} parent=5 // pred_fallthru
        _
    $region6: #{tpu_custom_call.1} parent=1 // loop_footer
      %s24 = sadd.s32 1, %s20
    $region7: #{tpu_custom_call.1} parent=1 // loop_footer_branch
      %19 = sbr.rel target = $region3
    $region8: #{tpu_custom_call.1} parent=1 // loop_exit
      _
    %2148 = vsyncpa [#allocation6], 1
    %s2149 = scalar_lea.sflag [#allocation6], 1
    %2150 = vsyncpa %s2149, 1

</llo_original>
